<compile_context>
chip_gen: v6e
topology: v6e:2x2x1
jax: 0.10.0
libtpu: 0.0.40
codegen_flags: <defaults>
</compile_context>

<pallas_src>
import jax
import jax.numpy as jnp
from jax.experimental import pallas as pl
from jax.experimental.pallas import tpu as pltpu

BN_EPS = 1e-5
FP_EPS = 1e-8
K_NEIGHBORS = 3
LANE = 128
SUBLANE = 8
FAR_COORD = 1.0e15          # coords of padded source points (never nearest)
BIG_DIST = 3.0e38           # masking value for already-selected distances
NUM_SPLITS = 2              # stats-pass shards (maps onto v7x's 2 TensorCores)


def _round_up(x, m):
    return ((x + m - 1) // m) * m


def _pad_axis(x, axis, new_size, value=0.0):
    pad = new_size - x.shape[axis]
    if pad <= 0:
        return x
    cfg = [(0, 0)] * x.ndim
    cfg[axis] = (0, pad)
    return jnp.pad(x, cfg, constant_values=value)


def _vmem_limit(block_bytes):
    # double-buffered blocks + generous scratch margin, capped under v7x's
    # 64 MiB physical VMEM (v5e/v6e have 128 MiB, so the cap is safe everywhere).
    est = 2 * block_bytes + (8 << 20)
    return int(min(56 << 20, max(32 << 20, est)))


# --------------------------------------------------------------------------
# Fused Linear + BatchNorm1d (training-mode global batch stats) + ReLU
#   pass 1: tiled matmul -> per-channel Welford partials (one per core shard)
#   pass 2: recompute the cheap matmul, normalize + affine + ReLU, store once
# --------------------------------------------------------------------------
def fc_bn_relu(points, w, b, gamma, beta, d_out_pad, *, tile_m=2048):
    B, N, d_in = points.shape
    d_out = w.shape[1]
    assert d_out_pad % LANE == 0 and d_out_pad >= d_out
    M = B * N

    tm = min(tile_m, _round_up(M, SUBLANE))          # row tile (multiple of 8)
    n_split = NUM_SPLITS if _round_up(M, tm) // tm >= NUM_SPLITS else 1
    m_pad = _round_up(M, tm * n_split)
    n_tiles = m_pad // tm
    tiles_per_split = n_tiles // n_split
    split_rows = tiles_per_split * tm
    n_pad_rows = m_pad - M
    inv_m = 1.0 / M
    inv_tm = 1.0 / tm

    # pad rows only; the contraction dim stays at the true d_in (no zero K work)
    x = _pad_axis(points.reshape(M, d_in), 0, m_pad)
    w_p = _pad_axis(w, 1, d_out_pad)
    b_p = _pad_axis(b.reshape(1, d_out), 1, d_out_pad)
    g_p = _pad_axis(gamma.reshape(1, d_out), 1, d_out_pad)
    be_p = _pad_axis(beta.reshape(1, d_out), 1, d_out_pad)

    # ---- pass 1: per-channel Welford partials (one partial per split/core) ----
    def stats_kernel(x_ref, w_ref, b_ref, mean_ref, m2_ref):
        i = pl.program_id(1)
        y = jnp.dot(x_ref[...], w_ref[...],
                    preferred_element_type=jnp.float32) + b_ref[...]
        t_mean = jnp.sum(y, axis=0, keepdims=True) * inv_tm
        yc = y - t_mean
        t_m2 = jnp.sum(yc * yc, axis=0, keepdims=True)

        @pl.when(i == 0)
        def _():
            mean_ref[0] = t_mean
            m2_ref[0] = t_m2

        @pl.when(i > 0)
        def _():
            n_a = (i * tm).astype(jnp.float32)
            n_ab = n_a + tm
            delta = t_mean - mean_ref[0]
            mean_ref[0] = mean_ref[0] + delta * (tm / n_ab)
            m2_ref[0] = m2_ref[0] + t_m2 + delta * delta * (n_a * tm / n_ab)

    blk1 = 4 * (tm * d_in + d_in * d_out_pad + 3 * d_out_pad)
    mean_parts, m2_parts = pl.pallas_call(
        stats_kernel,
        out_shape=(
            jax.ShapeDtypeStruct((n_split, 1, d_out_pad), jnp.float32),
            jax.ShapeDtypeStruct((n_split, 1, d_out_pad), jnp.float32),
        ),
        grid=(n_split, tiles_per_split),
        in_specs=[
            pl.BlockSpec((tm, d_in), lambda c, i: (c * tiles_per_split + i, 0)),
            pl.BlockSpec((d_in, d_out_pad), lambda c, i: (0, 0)),
            pl.BlockSpec((1, d_out_pad), lambda c, i: (0, 0)),
        ],
        out_specs=(
            pl.BlockSpec((1, 1, d_out_pad), lambda c, i: (c, 0, 0)),   # resident acc
            pl.BlockSpec((1, 1, d_out_pad), lambda c, i: (c, 0, 0)),   # resident acc
        ),
        compiler_params=pltpu.CompilerParams(
            dimension_semantics=("parallel", "arbitrary"),
            vmem_limit_bytes=_vmem_limit(blk1)),
    )(x, w_p, b_p)

    # ---- pass 2: recompute y (K is tiny) + fused BN + affine + ReLU ----
    def apply_kernel(x_ref, w_ref, b_ref, g_ref, be_ref, mean_ref, m2_ref, o_ref):
        y = jnp.dot(x_ref[...], w_ref[...],
                    preferred_element_type=jnp.float32) + b_ref[...]
        # combine per-split Welford partials (Chan's parallel formula)
        mean_t = mean_ref[0]
        m2_t = m2_ref[0]
        cnt = float(split_rows)
        for c in range(1, n_split):
            delta = mean_ref[c] - mean_t
            new_cnt = cnt + split_rows
            mean_t = mean_t + delta * (split_rows / new_cnt)
            m2_t = m2_t + m2_ref[c] + delta * delta * (cnt * split_rows / new_cnt)
            cnt = new_cnt
        # remove the padded rows from the stats: each pad row is exactly the bias
        if n_pad_rows > 0:
            bias = b_ref[...]
            mean_t = (mean_t * float(m_pad) - float(n_pad_rows) * bias) * inv_m
            d_b = bias - mean_t
            m2_t = m2_t - d_b * d_b * (float(M) * n_pad_rows / m_pad)
        var = jnp.maximum(m2_t * inv_m, 0.0)
        rstd = jax.lax.rsqrt(var + BN_EPS)
        o_ref[...] = jnp.maximum(g_ref[...] * (y - mean_t) * rstd + be_ref[...], 0.0)

    blk2 = 4 * (tm * d_in + d_in * d_out_pad + 3 * d_out_pad
                + 2 * n_split * d_out_pad + tm * d_out_pad)
    out = pl.pallas_call(
        apply_kernel,
        out_shape=jax.ShapeDtypeStruct((m_pad, d_out_pad), jnp.float32),
        grid=(n_tiles,),
        in_specs=[
            pl.BlockSpec((tm, d_in), lambda i: (i, 0)),
            pl.BlockSpec((d_in, d_out_pad), lambda i: (0, 0)),
            pl.BlockSpec((1, d_out_pad), lambda i: (0, 0)),
            pl.BlockSpec((1, d_out_pad), lambda i: (0, 0)),
            pl.BlockSpec((1, d_out_pad), lambda i: (0, 0)),
            pl.BlockSpec((n_split, 1, d_out_pad), lambda i: (0, 0, 0)),
            pl.BlockSpec((n_split, 1, d_out_pad), lambda i: (0, 0, 0)),
        ],
        out_specs=pl.BlockSpec((tm, d_out_pad), lambda i: (i, 0)),
        compiler_params=pltpu.CompilerParams(
            dimension_semantics=("parallel",),
            vmem_limit_bytes=_vmem_limit(blk2)),
    )(x, w_p, b_p, g_p, be_p, mean_parts, m2_parts)

    return out[:M].reshape(B, N, d_out_pad)


# --------------------------------------------------------------------------
# PointNetFeaturePropagation (mlp=[]) + residual add
#   For every target point, find the 3 nearest source points, inverse-distance
#   interpolate the source features, add the target-branch features.
# --------------------------------------------------------------------------
def feature_propagate_add(xyz_src, xyz_tgt, feats_src, feats_tgt,
                          *, tile_n2=128, tile_n1=512):
    B, N1, _ = xyz_src.shape
    _, N2, _ = xyz_tgt.shape
    c_pad = feats_src.shape[-1]

    chunk = min(tile_n1, _round_up(N1, LANE))       # source-axis chunk (lanes)
    n1_pad = _round_up(N1, chunk)
    n_chunks = n1_pad // chunk

    tn2 = min(tile_n2, _round_up(N2, SUBLANE))
    n2_pad = _round_up(N2, tn2)
    n2_tiles = n2_pad // tn2

    # source coords transposed so N1 sits on the lane axis; padded source points
    # get FAR coordinates (never nearest) and zero features.
    xs_t = _pad_axis(jnp.transpose(xyz_src, (0, 2, 1)), 2, n1_pad, FAR_COORD)
    fs = _pad_axis(feats_src, 1, n1_pad)
    xt = _pad_axis(xyz_tgt, 1, n2_pad)
    ft = _pad_axis(feats_tgt, 1, n2_pad)

    def interp_kernel(xs_t_ref, xt_ref, fs_ref, ft_ref, o_ref):
        xt_tile = xt_ref[0]                                   # (tn2, 3)
        xt_c = [xt_tile[:, c:c + 1] for c in range(3)]        # three (tn2, 1)

        big = jnp.float32(BIG_DIST)
        best_d = [jnp.full((tn2, 1), big, jnp.float32)] * K_NEIGHBORS
        best_i = [jnp.full((tn2, 1), n1_pad, jnp.int32)] * K_NEIGHBORS

        # pass A: chunked squared distances + running top-3 (distance, index).
        # working set per step stays at a few (tn2, chunk) arrays instead of
        # (tn2, n1_pad); d >= 0 by construction (no |a|^2-2ab+|b|^2 expansion).
        for s in range(n_chunks):
            off = s * chunk
            xs_c = xs_t_ref[0, :, off:off + chunk]            # (3, chunk)
            d = jnp.zeros((tn2, chunk), jnp.float32)
            for c in range(3):
                diff = xt_c[c] - xs_c[c:c + 1, :]
                d = d + diff * diff
            iota = jax.lax.broadcasted_iota(jnp.int32, (1, chunk), 1) + off

            # chunk-local top-3 (first-occurrence argmin == stable sort order)
            loc_d, loc_i = [], []
            for _ in range(K_NEIGHBORS):
                d_min = jnp.min(d, axis=1, keepdims=True)
                i_min = jnp.min(jnp.where(d == d_min, iota, n1_pad),
                                axis=1, keepdims=True)
                loc_d.append(d_min)
                loc_i.append(i_min)
                d = jnp.where(iota == i_min, big, d)

            if s == 0:
                best_d, best_i = loc_d, loc_i
            else:
                # merge two sorted 3-lists (carry first => earlier chunks /
                # smaller indices win ties); all ops are on tiny (tn2, 6) arrays
                cand_d = jnp.concatenate(best_d + loc_d, axis=1)
                cand_i = jnp.concatenate(best_i + loc_i, axis=1)
                pos = jax.lax.broadcasted_iota(jnp.int32, (1, 2 * K_NEIGHBORS), 1)
                best_d, best_i = [], []
                for _ in range(K_NEIGHBORS):
                    cd_min = jnp.min(cand_d, axis=1, keepdims=True)
                    p_min = jnp.min(
                        jnp.where(cand_d == cd_min, pos, 2 * K_NEIGHBORS),
                        axis=1, keepdims=True)
                    sel = pos == p_min
                    ci = jnp.sum(jnp.where(sel, cand_i, 0), axis=1, keepdims=True)
                    best_d.append(cd_min)
                    best_i.append(ci)
                    cand_d = jnp.where(sel, big, cand_d)

        # inverse-distance weights
        w_k = [1.0 / (best_d[k] + FP_EPS) for k in range(K_NEIGHBORS)]
        norm = w_k[0] + w_k[1] + w_k[2]

        # pass B: chunked sparse-weight gather on the MXU (<=3 nnz per row)
        acc = jnp.zeros((tn2, c_pad), jnp.float32)
        for s in range(n_chunks):
            off = s * chunk
            iota = jax.lax.broadcasted_iota(jnp.int32, (1, chunk), 1) + off
            w_chunk = jnp.zeros((tn2, chunk), jnp.float32)
            for k in range(K_NEIGHBORS):
                w_chunk = w_chunk + jnp.where(iota == best_i[k], w_k[k], 0.0)
            acc = acc + jnp.dot(w_chunk, fs_ref[0, off:off + chunk, :],
                                preferred_element_type=jnp.float32)

        o_ref[0] = acc / norm + ft_ref[0]

    blk = 4 * (3 * n1_pad + tn2 * 3 + n1_pad * c_pad + 2 * tn2 * c_pad)
    out = pl.pallas_call(
        interp_kernel,
        out_shape=jax.ShapeDtypeStruct((B, n2_pad, c_pad), jnp.float32),
        grid=(B, n2_tiles),
        in_specs=[
            pl.BlockSpec((1, 3, n1_pad), lambda b, j: (b, 0, 0)),      # resident in j
            pl.BlockSpec((1, tn2, 3), lambda b, j: (b, j, 0)),
            pl.BlockSpec((1, n1_pad, c_pad), lambda b, j: (b, 0, 0)),  # resident in j
            pl.BlockSpec((1, tn2, c_pad), lambda b, j: (b, j, 0)),
        ],
        out_specs=pl.BlockSpec((1, tn2, c_pad), lambda b, j: (b, j, 0)),
        compiler_params=pltpu.CompilerParams(
            dimension_semantics=("parallel", "parallel"),
            vmem_limit_bytes=_vmem_limit(blk)),
    )(xs_t, xt, fs, ft)
    return out[:, :N2, :]


# --------------------------------------------------------------------------
# TransitionUp forward
# --------------------------------------------------------------------------
@jax.jit
def transition_up(params, xyz1, points1, xyz2, points2):
    d_out = params["w1"].shape[1]
    d_out_pad = _round_up(d_out, LANE)
    feats1 = fc_bn_relu(points1, params["w1"], params["b1"],
                        params["g1"], params["be1"], d_out_pad)
    feats2 = fc_bn_relu(points2, params["w2"], params["b2"],
                        params["g2"], params["be2"], d_out_pad)
    # self.fp(xyz2.T, xyz1.T, None, feats1.T).T  ==  interpolate feats1 (living at
    # xyz1) onto the xyz2 locations with 3-NN inverse-distance weights, add feats2.
    out = feature_propagate_add(xyz1, xyz2, feats1, feats2)
    return out[..., :d_out]


def init_params(key, dim1, dim2, dim_out):
    k1, k2, k3, k4 = jax.random.split(key, 4)

    def linear_init(kw, kb, fan_in, fan_out):
        bound = 1.0 / (fan_in ** 0.5)
        w = jax.random.uniform(kw, (fan_in, fan_out), jnp.float32, -bound, bound)
        b = jax.random.uniform(kb, (fan_out,), jnp.float32, -bound, bound)
        return w, b

    w1, b1 = linear_init(k1, k2, dim1, dim_out)
    w2, b2 = linear_init(k3, k4, dim2, dim_out)
    gamma = jnp.ones((dim_out,), jnp.float32)
    beta = jnp.zeros((dim_out,), jnp.float32)
    return dict(w1=w1, b1=b1, g1=gamma, be1=beta, w2=w2, b2=b2, g2=gamma, be2=beta)


# --------------------------------------------------------------------------
# Pure-JAX reference (for correctness check)
# --------------------------------------------------------------------------
def transition_up_ref(params, xyz1, points1, xyz2, points2):
    def lin_bn_relu(x, w, b, g, beta):
        y = x @ w + b
        yf = y.reshape(-1, y.shape[-1])
        mean = yf.mean(axis=0)
        var = ((yf - mean) ** 2).mean(axis=0)
        yn = (y - mean) / jnp.sqrt(var + BN_EPS)
        return jnp.maximum(g * yn + beta, 0.0)

    f1 = lin_bn_relu(points1, params["w1"], params["b1"], params["g1"], params["be1"])
    f2 = lin_bn_relu(points2, params["w2"], params["b2"], params["g2"], params["be2"])

    d = jnp.sum((xyz2[:, :, None, :] - xyz1[:, None, :, :]) ** 2, axis=-1)  # (B,N2,N1)
    idx = jnp.argsort(d, axis=-1)[:, :, :K_NEIGHBORS]                        # (B,N2,3)
    dd = jnp.take_along_axis(d, idx, axis=-1)
    w = 1.0 / (dd + FP_EPS)
    w = w / jnp.sum(w, axis=-1, keepdims=True)
    gathered = jax.vmap(lambda f, i: f[i])(f1, idx)                          # (B,N2,3,C)
    interp = jnp.sum(gathered * w[..., None], axis=2)
    return interp + f2


if __name__ == "__main__":
    key = jax.random.PRNGKey(0)
    B, N1, N2 = 2, 8, 16
    dim1, dim2, dim_out = 32, 16, 64

    kp, k0, k1, k2, k3 = jax.random.split(key, 5)
    params = init_params(kp, dim1, dim2, dim_out)
    xyz1 = jax.random.normal(k0, (B, N1, 3), jnp.float32)
    points1 = jax.random.normal(k1, (B, N1, dim1), jnp.float32)
    xyz2 = jax.random.normal(k2, (B, N2, 3), jnp.float32)
    points2 = jax.random.normal(k3, (B, N2, dim2), jnp.float32)

    out = transition_up(params, xyz1, points1, xyz2, points2)
    out = jax.block_until_ready(out)

    ref = transition_up_ref(params, xyz1, points1, xyz2, points2)
    assert out.shape == (B, N2, dim_out)
    if not jnp.allclose(out, ref, atol=1e-4, rtol=1e-4):
        raise AssertionError(
            "mismatch vs pure-JAX reference, max abs err = "
            f"{float(jnp.max(jnp.abs(out - ref)))}")
    print("KERNEL_OK")
</pallas_src>

<mosaic_0001>
module attributes {stable_mosaic.version = 11 : i64} {
  func.func @stats_kernel(%arg0: i32, %arg1: i32, %arg2: memref<32x16xf32, #tpu.memory_space<vmem>>, %arg3: memref<16x128xf32, #tpu.memory_space<vmem>>, %arg4: memref<1x128xf32, #tpu.memory_space<vmem>>, %arg5: memref<1x1x128xf32, #tpu.memory_space<vmem>>, %arg6: memref<1x1x128xf32, #tpu.memory_space<vmem>>) attributes {dimension_semantics = [#tpu.dimension_semantics<parallel>, #tpu.dimension_semantics<arbitrary>], iteration_bounds = array<i64: 1, 1>, scalar_prefetch = 0 : i64, scratch_operands = 0 : i64, tpu.core_type = #tpu.core_type<tc>, window_params = [{transform_indices = @transform_0, window_bounds = array<i64: 32, 16>}, {pipeline_mode = #tpu.pipeline_mode<synchronous>, transform_indices = @transform_1, window_bounds = array<i64: 16, 128>}, {pipeline_mode = #tpu.pipeline_mode<synchronous>, transform_indices = @transform_2, window_bounds = array<i64: 1, 128>}, {transform_indices = @transform_3, window_bounds = array<i64: 1, 1, 128>}, {transform_indices = @transform_4, window_bounds = array<i64: 1, 1, 128>}]} {
    %c0 = arith.constant 0 : index
    %c0_0 = arith.constant 0 : index
    %0 = vector.load %arg2[%c0, %c0_0] : memref<32x16xf32, #tpu.memory_space<vmem>>, vector<32x16xf32>
    %c0_1 = arith.constant 0 : index
    %c0_2 = arith.constant 0 : index
    %1 = vector.load %arg3[%c0_1, %c0_2] : memref<16x128xf32, #tpu.memory_space<vmem>>, vector<16x128xf32>
    %cst = arith.constant dense<0.000000e+00> : vector<32x128xf32>
    %2 = tpu.matmul %0, %1, %cst {dimension_numbers = #tpu.dot_dimension_numbers<[1], [0], [0], [1], [0, 0, 1, 1], [], []>} : vector<32x16xf32>, vector<16x128xf32>, vector<32x128xf32> -> vector<32x128xf32>
    %c0_3 = arith.constant 0 : index
    %c0_4 = arith.constant 0 : index
    %3 = vector.load %arg4[%c0_3, %c0_4] : memref<1x128xf32, #tpu.memory_space<vmem>>, vector<1x128xf32>
    %4 = vector.broadcast %3 : vector<1x128xf32> to vector<32x128xf32>
    %5 = arith.addf %2, %4 : vector<32x128xf32>
    %cst_5 = arith.constant dense<0.000000e+00> : vector<128xf32>
    %6 = vector.multi_reduction <add>, %5, %cst_5 [0] : vector<32x128xf32> to vector<128xf32>
    %7 = vector.shape_cast %6 : vector<128xf32> to vector<1x128xf32>
    %cst_6 = arith.constant 3.125000e-02 : f32
    %8 = vector.broadcast %cst_6 : f32 to vector<1x128xf32>
    %9 = arith.mulf %7, %8 : vector<1x128xf32>
    %10 = vector.broadcast %9 : vector<1x128xf32> to vector<32x128xf32>
    %11 = arith.subf %5, %10 : vector<32x128xf32>
    %12 = arith.mulf %11, %11 : vector<32x128xf32>
    %cst_7 = arith.constant dense<0.000000e+00> : vector<128xf32>
    %13 = vector.multi_reduction <add>, %12, %cst_7 [0] : vector<32x128xf32> to vector<128xf32>
    %14 = vector.shape_cast %13 : vector<128xf32> to vector<1x128xf32>
    %c0_i32 = arith.constant 0 : i32
    %15 = arith.cmpi eq, %arg1, %c0_i32 : i32
    %16 = arith.extui %15 : i1 to i32
    %c0_i32_8 = arith.constant 0 : i32
    %17 = arith.cmpi ne, %16, %c0_i32_8 : i32
    scf.if %17 {
      %c0_11 = arith.constant 0 : index
      %c0_12 = arith.constant 0 : index
      %c0_13 = arith.constant 0 : index
      %21 = vector.load %arg5[%c0_11, %c0_12, %c0_13] : memref<1x1x128xf32, #tpu.memory_space<vmem>>, vector<1x1x128xf32>
      %22 = vector.shape_cast %21 : vector<1x1x128xf32> to vector<1x128xf32>
      %23 = vector.shape_cast %9 : vector<1x128xf32> to vector<1x1x128xf32>
      tpu.vector_store %arg5[%c0_11, %c0_12, %c0_13], %23 {strides = array<i32>} : memref<1x1x128xf32, #tpu.memory_space<vmem>>, vector<1x1x128xf32>,
      %c0_14 = arith.constant 0 : index
      %c0_15 = arith.constant 0 : index
      %c0_16 = arith.constant 0 : index
      %24 = vector.load %arg6[%c0_14, %c0_15, %c0_16] : memref<1x1x128xf32, #tpu.memory_space<vmem>>, vector<1x1x128xf32>
      %25 = vector.shape_cast %24 : vector<1x1x128xf32> to vector<1x128xf32>
      %26 = vector.shape_cast %14 : vector<1x128xf32> to vector<1x1x128xf32>
      tpu.vector_store %arg6[%c0_14, %c0_15, %c0_16], %26 {strides = array<i32>} : memref<1x1x128xf32, #tpu.memory_space<vmem>>, vector<1x1x128xf32>,
    } else {
    }
    %c0_i32_9 = arith.constant 0 : i32
    %18 = arith.cmpi sgt, %arg1, %c0_i32_9 : i32
    %19 = arith.extui %18 : i1 to i32
    %c0_i32_10 = arith.constant 0 : i32
    %20 = arith.cmpi ne, %19, %c0_i32_10 : i32
    scf.if %20 {
      %c32_i32 = arith.constant 32 : i32
      %21 = arith.muli %arg1, %c32_i32 : i32
      %22 = arith.sitofp %21 : i32 to f32
      %cst_11 = arith.constant 3.200000e+01 : f32
      %23 = arith.addf %22, %cst_11 : f32
      %c0_12 = arith.constant 0 : index
      %c0_13 = arith.constant 0 : index
      %c0_14 = arith.constant 0 : index
      %24 = vector.load %arg5[%c0_12, %c0_13, %c0_14] : memref<1x1x128xf32, #tpu.memory_space<vmem>>, vector<1x1x128xf32>
      %25 = vector.shape_cast %24 : vector<1x1x128xf32> to vector<1x128xf32>
      %26 = arith.subf %9, %25 : vector<1x128xf32>
      %c0_15 = arith.constant 0 : index
      %c0_16 = arith.constant 0 : index
      %c0_17 = arith.constant 0 : index
      %27 = vector.load %arg5[%c0_15, %c0_16, %c0_17] : memref<1x1x128xf32, #tpu.memory_space<vmem>>, vector<1x1x128xf32>
      %28 = vector.shape_cast %27 : vector<1x1x128xf32> to vector<1x128xf32>
      %cst_18 = arith.constant 3.200000e+01 : f32
      %29 = arith.divf %cst_18, %23 : f32
      %30 = vector.broadcast %29 : f32 to vector<1x128xf32>
      %31 = arith.mulf %26, %30 : vector<1x128xf32>
      %32 = arith.addf %28, %31 : vector<1x128xf32>
      %c0_19 = arith.constant 0 : index
      %c0_20 = arith.constant 0 : index
      %c0_21 = arith.constant 0 : index
      %33 = vector.load %arg5[%c0_19, %c0_20, %c0_21] : memref<1x1x128xf32, #tpu.memory_space<vmem>>, vector<1x1x128xf32>
      %34 = vector.shape_cast %33 : vector<1x1x128xf32> to vector<1x128xf32>
      %35 = vector.shape_cast %32 : vector<1x128xf32> to vector<1x1x128xf32>
      tpu.vector_store %arg5[%c0_19, %c0_20, %c0_21], %35 {strides = array<i32>} : memref<1x1x128xf32, #tpu.memory_space<vmem>>, vector<1x1x128xf32>,
      %c0_22 = arith.constant 0 : index
      %c0_23 = arith.constant 0 : index
      %c0_24 = arith.constant 0 : index
      %36 = vector.load %arg6[%c0_22, %c0_23, %c0_24] : memref<1x1x128xf32, #tpu.memory_space<vmem>>, vector<1x1x128xf32>
      %37 = vector.shape_cast %36 : vector<1x1x128xf32> to vector<1x128xf32>
      %38 = arith.addf %37, %14 : vector<1x128xf32>
      %39 = arith.mulf %26, %26 : vector<1x128xf32>
      %cst_25 = arith.constant 3.200000e+01 : f32
      %40 = arith.mulf %22, %cst_25 : f32
      %41 = arith.divf %40, %23 : f32
      %42 = vector.broadcast %41 : f32 to vector<1x128xf32>
      %43 = arith.mulf %39, %42 : vector<1x128xf32>
      %44 = arith.addf %38, %43 : vector<1x128xf32>
      %c0_26 = arith.constant 0 : index
      %c0_27 = arith.constant 0 : index
      %c0_28 = arith.constant 0 : index
      %45 = vector.load %arg6[%c0_26, %c0_27, %c0_28] : memref<1x1x128xf32, #tpu.memory_space<vmem>>, vector<1x1x128xf32>
      %46 = vector.shape_cast %45 : vector<1x1x128xf32> to vector<1x128xf32>
      %47 = vector.shape_cast %44 : vector<1x128xf32> to vector<1x1x128xf32>
      tpu.vector_store %arg6[%c0_26, %c0_27, %c0_28], %47 {strides = array<i32>} : memref<1x1x128xf32, #tpu.memory_space<vmem>>, vector<1x1x128xf32>,
    } else {
    }
    return
  }
  func.func @transform_0(%arg0: i32, %arg1: i32) -> (i32, i32) {
    %c1_i32 = arith.constant 1 : i32
    %0 = arith.muli %arg0, %c1_i32 : i32
    %1 = arith.addi %0, %arg1 : i32
    %c0_i32 = arith.constant 0 : i32
    %c0_i32_0 = arith.constant 0 : i32
    return %1, %c0_i32 : i32, i32
  }
  func.func @transform_1(%arg0: i32, %arg1: i32) -> (i32, i32) {
    %c0_i32 = arith.constant 0 : i32
    %c0_i32_0 = arith.constant 0 : i32
    %c0_i32_1 = arith.constant 0 : i32
    return %c0_i32, %c0_i32_0 : i32, i32
  }
  func.func @transform_2(%arg0: i32, %arg1: i32) -> (i32, i32) {
    %c0_i32 = arith.constant 0 : i32
    %c0_i32_0 = arith.constant 0 : i32
    %c0_i32_1 = arith.constant 0 : i32
    return %c0_i32, %c0_i32_0 : i32, i32
  }
  func.func @transform_3(%arg0: i32, %arg1: i32) -> (i32, i32, i32) {
    %c0_i32 = arith.constant 0 : i32
    %c0_i32_0 = arith.constant 0 : i32
    %c0_i32_1 = arith.constant 0 : i32
    return %arg0, %c0_i32, %c0_i32_0 : i32, i32, i32
  }
  func.func @transform_4(%arg0: i32, %arg1: i32) -> (i32, i32, i32) {
    %c0_i32 = arith.constant 0 : i32
    %c0_i32_0 = arith.constant 0 : i32
    %c0_i32_1 = arith.constant 0 : i32
    return %arg0, %c0_i32, %c0_i32_0 : i32, i32, i32
  }
}

module attributes {stable_mosaic.version = 11 : i64} {
  func.func @apply_kernel(%arg0: i32, %arg1: memref<32x16xf32, #tpu.memory_space<vmem>>, %arg2: memref<16x128xf32, #tpu.memory_space<vmem>>, %arg3: memref<1x128xf32, #tpu.memory_space<vmem>>, %arg4: memref<1x128xf32, #tpu.memory_space<vmem>>, %arg5: memref<1x128xf32, #tpu.memory_space<vmem>>, %arg6: memref<1x1x128xf32, #tpu.memory_space<vmem>>, %arg7: memref<1x1x128xf32, #tpu.memory_space<vmem>>, %arg8: memref<32x128xf32, #tpu.memory_space<vmem>>) attributes {dimension_semantics = [#tpu.dimension_semantics<parallel>], iteration_bounds = array<i64: 1>, scalar_prefetch = 0 : i64, scratch_operands = 0 : i64, tpu.core_type = #tpu.core_type<tc>, window_params = [{transform_indices = @transform_0, window_bounds = array<i64: 32, 16>}, {pipeline_mode = #tpu.pipeline_mode<synchronous>, transform_indices = @transform_1, window_bounds = array<i64: 16, 128>}, {pipeline_mode = #tpu.pipeline_mode<synchronous>, transform_indices = @transform_2, window_bounds = array<i64: 1, 128>}, {pipeline_mode = #tpu.pipeline_mode<synchronous>, transform_indices = @transform_3, window_bounds = array<i64: 1, 128>}, {pipeline_mode = #tpu.pipeline_mode<synchronous>, transform_indices = @transform_4, window_bounds = array<i64: 1, 128>}, {pipeline_mode = #tpu.pipeline_mode<synchronous>, transform_indices = @transform_5, window_bounds = array<i64: 1, 1, 128>}, {pipeline_mode = #tpu.pipeline_mode<synchronous>, transform_indices = @transform_6, window_bounds = array<i64: 1, 1, 128>}, {transform_indices = @transform_7, window_bounds = array<i64: 32, 128>}]} {
    %c0 = arith.constant 0 : index
    %c0_0 = arith.constant 0 : index
    %0 = vector.load %arg1[%c0, %c0_0] : memref<32x16xf32, #tpu.memory_space<vmem>>, vector<32x16xf32>
    %c0_1 = arith.constant 0 : index
    %c0_2 = arith.constant 0 : index
    %1 = vector.load %arg2[%c0_1, %c0_2] : memref<16x128xf32, #tpu.memory_space<vmem>>, vector<16x128xf32>
    %cst = arith.constant dense<0.000000e+00> : vector<32x128xf32>
    %2 = tpu.matmul %0, %1, %cst {dimension_numbers = #tpu.dot_dimension_numbers<[1], [0], [0], [1], [0, 0, 1, 1], [], []>} : vector<32x16xf32>, vector<16x128xf32>, vector<32x128xf32> -> vector<32x128xf32>
    %c0_3 = arith.constant 0 : index
    %c0_4 = arith.constant 0 : index
    %3 = vector.load %arg3[%c0_3, %c0_4] : memref<1x128xf32, #tpu.memory_space<vmem>>, vector<1x128xf32>
    %4 = vector.broadcast %3 : vector<1x128xf32> to vector<32x128xf32>
    %5 = arith.addf %2, %4 : vector<32x128xf32>
    %c0_5 = arith.constant 0 : index
    %c0_6 = arith.constant 0 : index
    %c0_7 = arith.constant 0 : index
    %6 = vector.load %arg6[%c0_5, %c0_6, %c0_7] : memref<1x1x128xf32, #tpu.memory_space<vmem>>, vector<1x1x128xf32>
    %7 = vector.shape_cast %6 : vector<1x1x128xf32> to vector<1x128xf32>
    %c0_8 = arith.constant 0 : index
    %c0_9 = arith.constant 0 : index
    %c0_10 = arith.constant 0 : index
    %8 = vector.load %arg7[%c0_8, %c0_9, %c0_10] : memref<1x1x128xf32, #tpu.memory_space<vmem>>, vector<1x1x128xf32>
    %9 = vector.shape_cast %8 : vector<1x1x128xf32> to vector<1x128xf32>
    %cst_11 = arith.constant 3.125000e-02 : f32
    %10 = vector.broadcast %cst_11 : f32 to vector<1x128xf32>
    %11 = arith.mulf %9, %10 : vector<1x128xf32>
    %cst_12 = arith.constant 0.000000e+00 : f32
    %12 = vector.broadcast %cst_12 : f32 to vector<1x128xf32>
    %13 = arith.maximumf %11, %12 : vector<1x128xf32>
    %cst_13 = arith.constant 9.99999974E-6 : f32
    %14 = vector.broadcast %cst_13 : f32 to vector<1x128xf32>
    %15 = arith.addf %13, %14 : vector<1x128xf32>
    %16 = math.rsqrt %15 : vector<1x128xf32>
    %c0_14 = arith.constant 0 : index
    %c0_15 = arith.constant 0 : index
    %17 = vector.load %arg4[%c0_14, %c0_15] : memref<1x128xf32, #tpu.memory_space<vmem>>, vector<1x128xf32>
    %18 = vector.broadcast %7 : vector<1x128xf32> to vector<32x128xf32>
    %19 = arith.subf %5, %18 : vector<32x128xf32>
    %20 = vector.broadcast %17 : vector<1x128xf32> to vector<32x128xf32>
    %21 = arith.mulf %20, %19 : vector<32x128xf32>
    %22 = vector.broadcast %16 : vector<1x128xf32> to vector<32x128xf32>
    %23 = arith.mulf %21, %22 : vector<32x128xf32>
    %c0_16 = arith.constant 0 : index
    %c0_17 = arith.constant 0 : index
    %24 = vector.load %arg5[%c0_16, %c0_17] : memref<1x128xf32, #tpu.memory_space<vmem>>, vector<1x128xf32>
    %25 = vector.broadcast %24 : vector<1x128xf32> to vector<32x128xf32>
    %26 = arith.addf %23, %25 : vector<32x128xf32>
    %cst_18 = arith.constant 0.000000e+00 : f32
    %27 = vector.broadcast %cst_18 : f32 to vector<32x128xf32>
    %28 = arith.maximumf %26, %27 : vector<32x128xf32>
    %c0_19 = arith.constant 0 : index
    %c0_20 = arith.constant 0 : index
    %29 = vector.load %arg8[%c0_19, %c0_20] : memref<32x128xf32, #tpu.memory_space<vmem>>, vector<32x128xf32>
    tpu.vector_store %arg8[%c0_19, %c0_20], %28 {strides = array<i32>} : memref<32x128xf32, #tpu.memory_space<vmem>>, vector<32x128xf32>,
    return
  }
  func.func @transform_0(%arg0: i32) -> (i32, i32) {
    %c0_i32 = arith.constant 0 : i32
    %c0_i32_0 = arith.constant 0 : i32
    return %arg0, %c0_i32 : i32, i32
  }
  func.func @transform_1(%arg0: i32) -> (i32, i32) {
    %c0_i32 = arith.constant 0 : i32
    %c0_i32_0 = arith.constant 0 : i32
    %c0_i32_1 = arith.constant 0 : i32
    return %c0_i32, %c0_i32_0 : i32, i32
  }
  func.func @transform_2(%arg0: i32) -> (i32, i32) {
    %c0_i32 = arith.constant 0 : i32
    %c0_i32_0 = arith.constant 0 : i32
    %c0_i32_1 = arith.constant 0 : i32
    return %c0_i32, %c0_i32_0 : i32, i32
  }
  func.func @transform_3(%arg0: i32) -> (i32, i32) {
    %c0_i32 = arith.constant 0 : i32
    %c0_i32_0 = arith.constant 0 : i32
    %c0_i32_1 = arith.constant 0 : i32
    return %c0_i32, %c0_i32_0 : i32, i32
  }
  func.func @transform_4(%arg0: i32) -> (i32, i32) {
    %c0_i32 = arith.constant 0 : i32
    %c0_i32_0 = arith.constant 0 : i32
    %c0_i32_1 = arith.constant 0 : i32
    return %c0_i32, %c0_i32_0 : i32, i32
  }
  func.func @transform_5(%arg0: i32) -> (i32, i32, i32) {
    %c0_i32 = arith.constant 0 : i32
    %c0_i32_0 = arith.constant 0 : i32
    %c0_i32_1 = arith.constant 0 : i32
    %c0_i32_2 = arith.constant 0 : i32
    return %c0_i32, %c0_i32_0, %c0_i32_1 : i32, i32, i32
  }
  func.func @transform_6(%arg0: i32) -> (i32, i32, i32) {
    %c0_i32 = arith.constant 0 : i32
    %c0_i32_0 = arith.constant 0 : i32
    %c0_i32_1 = arith.constant 0 : i32
    %c0_i32_2 = arith.constant 0 : i32
    return %c0_i32, %c0_i32_0, %c0_i32_1 : i32, i32, i32
  }
  func.func @transform_7(%arg0: i32) -> (i32, i32) {
    %c0_i32 = arith.constant 0 : i32
    %c0_i32_0 = arith.constant 0 : i32
    return %arg0, %c0_i32 : i32, i32
  }
}

module attributes {stable_mosaic.version = 11 : i64} {
  func.func @stats_kernel(%arg0: i32, %arg1: i32, %arg2: memref<16x32xf32, #tpu.memory_space<vmem>>, %arg3: memref<32x128xf32, #tpu.memory_space<vmem>>, %arg4: memref<1x128xf32, #tpu.memory_space<vmem>>, %arg5: memref<1x1x128xf32, #tpu.memory_space<vmem>>, %arg6: memref<1x1x128xf32, #tpu.memory_space<vmem>>) attributes {dimension_semantics = [#tpu.dimension_semantics<parallel>, #tpu.dimension_semantics<arbitrary>], iteration_bounds = array<i64: 1, 1>, scalar_prefetch = 0 : i64, scratch_operands = 0 : i64, tpu.core_type = #tpu.core_type<tc>, window_params = [{transform_indices = @transform_0, window_bounds = array<i64: 16, 32>}, {pipeline_mode = #tpu.pipeline_mode<synchronous>, transform_indices = @transform_1, window_bounds = array<i64: 32, 128>}, {pipeline_mode = #tpu.pipeline_mode<synchronous>, transform_indices = @transform_2, window_bounds = array<i64: 1, 128>}, {transform_indices = @transform_3, window_bounds = array<i64: 1, 1, 128>}, {transform_indices = @transform_4, window_bounds = array<i64: 1, 1, 128>}]} {
    %c0 = arith.constant 0 : index
    %c0_0 = arith.constant 0 : index
    %0 = vector.load %arg2[%c0, %c0_0] : memref<16x32xf32, #tpu.memory_space<vmem>>, vector<16x32xf32>
    %c0_1 = arith.constant 0 : index
    %c0_2 = arith.constant 0 : index
    %1 = vector.load %arg3[%c0_1, %c0_2] : memref<32x128xf32, #tpu.memory_space<vmem>>, vector<32x128xf32>
    %cst = arith.constant dense<0.000000e+00> : vector<16x128xf32>
    %2 = tpu.matmul %0, %1, %cst {dimension_numbers = #tpu.dot_dimension_numbers<[1], [0], [0], [1], [0, 0, 1, 1], [], []>} : vector<16x32xf32>, vector<32x128xf32>, vector<16x128xf32> -> vector<16x128xf32>
    %c0_3 = arith.constant 0 : index
    %c0_4 = arith.constant 0 : index
    %3 = vector.load %arg4[%c0_3, %c0_4] : memref<1x128xf32, #tpu.memory_space<vmem>>, vector<1x128xf32>
    %4 = vector.broadcast %3 : vector<1x128xf32> to vector<16x128xf32>
    %5 = arith.addf %2, %4 : vector<16x128xf32>
    %cst_5 = arith.constant dense<0.000000e+00> : vector<128xf32>
    %6 = vector.multi_reduction <add>, %5, %cst_5 [0] : vector<16x128xf32> to vector<128xf32>
    %7 = vector.shape_cast %6 : vector<128xf32> to vector<1x128xf32>
    %cst_6 = arith.constant 6.250000e-02 : f32
    %8 = vector.broadcast %cst_6 : f32 to vector<1x128xf32>
    %9 = arith.mulf %7, %8 : vector<1x128xf32>
    %10 = vector.broadcast %9 : vector<1x128xf32> to vector<16x128xf32>
    %11 = arith.subf %5, %10 : vector<16x128xf32>
    %12 = arith.mulf %11, %11 : vector<16x128xf32>
    %cst_7 = arith.constant dense<0.000000e+00> : vector<128xf32>
    %13 = vector.multi_reduction <add>, %12, %cst_7 [0] : vector<16x128xf32> to vector<128xf32>
    %14 = vector.shape_cast %13 : vector<128xf32> to vector<1x128xf32>
    %c0_i32 = arith.constant 0 : i32
    %15 = arith.cmpi eq, %arg1, %c0_i32 : i32
    %16 = arith.extui %15 : i1 to i32
    %c0_i32_8 = arith.constant 0 : i32
    %17 = arith.cmpi ne, %16, %c0_i32_8 : i32
    scf.if %17 {
      %c0_11 = arith.constant 0 : index
      %c0_12 = arith.constant 0 : index
      %c0_13 = arith.constant 0 : index
      %21 = vector.load %arg5[%c0_11, %c0_12, %c0_13] : memref<1x1x128xf32, #tpu.memory_space<vmem>>, vector<1x1x128xf32>
      %22 = vector.shape_cast %21 : vector<1x1x128xf32> to vector<1x128xf32>
      %23 = vector.shape_cast %9 : vector<1x128xf32> to vector<1x1x128xf32>
      tpu.vector_store %arg5[%c0_11, %c0_12, %c0_13], %23 {strides = array<i32>} : memref<1x1x128xf32, #tpu.memory_space<vmem>>, vector<1x1x128xf32>,
      %c0_14 = arith.constant 0 : index
      %c0_15 = arith.constant 0 : index
      %c0_16 = arith.constant 0 : index
      %24 = vector.load %arg6[%c0_14, %c0_15, %c0_16] : memref<1x1x128xf32, #tpu.memory_space<vmem>>, vector<1x1x128xf32>
      %25 = vector.shape_cast %24 : vector<1x1x128xf32> to vector<1x128xf32>
      %26 = vector.shape_cast %14 : vector<1x128xf32> to vector<1x1x128xf32>
      tpu.vector_store %arg6[%c0_14, %c0_15, %c0_16], %26 {strides = array<i32>} : memref<1x1x128xf32, #tpu.memory_space<vmem>>, vector<1x1x128xf32>,
    } else {
    }
    %c0_i32_9 = arith.constant 0 : i32
    %18 = arith.cmpi sgt, %arg1, %c0_i32_9 : i32
    %19 = arith.extui %18 : i1 to i32
    %c0_i32_10 = arith.constant 0 : i32
    %20 = arith.cmpi ne, %19, %c0_i32_10 : i32
    scf.if %20 {
      %c16_i32 = arith.constant 16 : i32
      %21 = arith.muli %arg1, %c16_i32 : i32
      %22 = arith.sitofp %21 : i32 to f32
      %cst_11 = arith.constant 1.600000e+01 : f32
      %23 = arith.addf %22, %cst_11 : f32
      %c0_12 = arith.constant 0 : index
      %c0_13 = arith.constant 0 : index
      %c0_14 = arith.constant 0 : index
      %24 = vector.load %arg5[%c0_12, %c0_13, %c0_14] : memref<1x1x128xf32, #tpu.memory_space<vmem>>, vector<1x1x128xf32>
      %25 = vector.shape_cast %24 : vector<1x1x128xf32> to vector<1x128xf32>
      %26 = arith.subf %9, %25 : vector<1x128xf32>
      %c0_15 = arith.constant 0 : index
      %c0_16 = arith.constant 0 : index
      %c0_17 = arith.constant 0 : index
      %27 = vector.load %arg5[%c0_15, %c0_16, %c0_17] : memref<1x1x128xf32, #tpu.memory_space<vmem>>, vector<1x1x128xf32>
      %28 = vector.shape_cast %27 : vector<1x1x128xf32> to vector<1x128xf32>
      %cst_18 = arith.constant 1.600000e+01 : f32
      %29 = arith.divf %cst_18, %23 : f32
      %30 = vector.broadcast %29 : f32 to vector<1x128xf32>
      %31 = arith.mulf %26, %30 : vector<1x128xf32>
      %32 = arith.addf %28, %31 : vector<1x128xf32>
      %c0_19 = arith.constant 0 : index
      %c0_20 = arith.constant 0 : index
      %c0_21 = arith.constant 0 : index
      %33 = vector.load %arg5[%c0_19, %c0_20, %c0_21] : memref<1x1x128xf32, #tpu.memory_space<vmem>>, vector<1x1x128xf32>
      %34 = vector.shape_cast %33 : vector<1x1x128xf32> to vector<1x128xf32>
      %35 = vector.shape_cast %32 : vector<1x128xf32> to vector<1x1x128xf32>
      tpu.vector_store %arg5[%c0_19, %c0_20, %c0_21], %35 {strides = array<i32>} : memref<1x1x128xf32, #tpu.memory_space<vmem>>, vector<1x1x128xf32>,
      %c0_22 = arith.constant 0 : index
      %c0_23 = arith.constant 0 : index
      %c0_24 = arith.constant 0 : index
      %36 = vector.load %arg6[%c0_22, %c0_23, %c0_24] : memref<1x1x128xf32, #tpu.memory_space<vmem>>, vector<1x1x128xf32>
      %37 = vector.shape_cast %36 : vector<1x1x128xf32> to vector<1x128xf32>
      %38 = arith.addf %37, %14 : vector<1x128xf32>
      %39 = arith.mulf %26, %26 : vector<1x128xf32>
      %cst_25 = arith.constant 1.600000e+01 : f32
      %40 = arith.mulf %22, %cst_25 : f32
      %41 = arith.divf %40, %23 : f32
      %42 = vector.broadcast %41 : f32 to vector<1x128xf32>
      %43 = arith.mulf %39, %42 : vector<1x128xf32>
      %44 = arith.addf %38, %43 : vector<1x128xf32>
      %c0_26 = arith.constant 0 : index
      %c0_27 = arith.constant 0 : index
      %c0_28 = arith.constant 0 : index
      %45 = vector.load %arg6[%c0_26, %c0_27, %c0_28] : memref<1x1x128xf32, #tpu.memory_space<vmem>>, vector<1x1x128xf32>
      %46 = vector.shape_cast %45 : vector<1x1x128xf32> to vector<1x128xf32>
      %47 = vector.shape_cast %44 : vector<1x128xf32> to vector<1x1x128xf32>
      tpu.vector_store %arg6[%c0_26, %c0_27, %c0_28], %47 {strides = array<i32>} : memref<1x1x128xf32, #tpu.memory_space<vmem>>, vector<1x1x128xf32>,
    } else {
    }
    return
  }
  func.func @transform_0(%arg0: i32, %arg1: i32) -> (i32, i32) {
    %c1_i32 = arith.constant 1 : i32
    %0 = arith.muli %arg0, %c1_i32 : i32
    %1 = arith.addi %0, %arg1 : i32
    %c0_i32 = arith.constant 0 : i32
    %c0_i32_0 = arith.constant 0 : i32
    return %1, %c0_i32 : i32, i32
  }
  func.func @transform_1(%arg0: i32, %arg1: i32) -> (i32, i32) {
    %c0_i32 = arith.constant 0 : i32
    %c0_i32_0 = arith.constant 0 : i32
    %c0_i32_1 = arith.constant 0 : i32
    return %c0_i32, %c0_i32_0 : i32, i32
  }
  func.func @transform_2(%arg0: i32, %arg1: i32) -> (i32, i32) {
    %c0_i32 = arith.constant 0 : i32
    %c0_i32_0 = arith.constant 0 : i32
    %c0_i32_1 = arith.constant 0 : i32
    return %c0_i32, %c0_i32_0 : i32, i32
  }
  func.func @transform_3(%arg0: i32, %arg1: i32) -> (i32, i32, i32) {
    %c0_i32 = arith.constant 0 : i32
    %c0_i32_0 = arith.constant 0 : i32
    %c0_i32_1 = arith.constant 0 : i32
    return %arg0, %c0_i32, %c0_i32_0 : i32, i32, i32
  }
  func.func @transform_4(%arg0: i32, %arg1: i32) -> (i32, i32, i32) {
    %c0_i32 = arith.constant 0 : i32
    %c0_i32_0 = arith.constant 0 : i32
    %c0_i32_1 = arith.constant 0 : i32
    return %arg0, %c0_i32, %c0_i32_0 : i32, i32, i32
  }
}

module attributes {stable_mosaic.version = 11 : i64} {
  func.func @apply_kernel(%arg0: i32, %arg1: memref<16x32xf32, #tpu.memory_space<vmem>>, %arg2: memref<32x128xf32, #tpu.memory_space<vmem>>, %arg3: memref<1x128xf32, #tpu.memory_space<vmem>>, %arg4: memref<1x128xf32, #tpu.memory_space<vmem>>, %arg5: memref<1x128xf32, #tpu.memory_space<vmem>>, %arg6: memref<1x1x128xf32, #tpu.memory_space<vmem>>, %arg7: memref<1x1x128xf32, #tpu.memory_space<vmem>>, %arg8: memref<16x128xf32, #tpu.memory_space<vmem>>) attributes {dimension_semantics = [#tpu.dimension_semantics<parallel>], iteration_bounds = array<i64: 1>, scalar_prefetch = 0 : i64, scratch_operands = 0 : i64, tpu.core_type = #tpu.core_type<tc>, window_params = [{transform_indices = @transform_0, window_bounds = array<i64: 16, 32>}, {pipeline_mode = #tpu.pipeline_mode<synchronous>, transform_indices = @transform_1, window_bounds = array<i64: 32, 128>}, {pipeline_mode = #tpu.pipeline_mode<synchronous>, transform_indices = @transform_2, window_bounds = array<i64: 1, 128>}, {pipeline_mode = #tpu.pipeline_mode<synchronous>, transform_indices = @transform_3, window_bounds = array<i64: 1, 128>}, {pipeline_mode = #tpu.pipeline_mode<synchronous>, transform_indices = @transform_4, window_bounds = array<i64: 1, 128>}, {pipeline_mode = #tpu.pipeline_mode<synchronous>, transform_indices = @transform_5, window_bounds = array<i64: 1, 1, 128>}, {pipeline_mode = #tpu.pipeline_mode<synchronous>, transform_indices = @transform_6, window_bounds = array<i64: 1, 1, 128>}, {transform_indices = @transform_7, window_bounds = array<i64: 16, 128>}]} {
    %c0 = arith.constant 0 : index
    %c0_0 = arith.constant 0 : index
    %0 = vector.load %arg1[%c0, %c0_0] : memref<16x32xf32, #tpu.memory_space<vmem>>, vector<16x32xf32>
    %c0_1 = arith.constant 0 : index
    %c0_2 = arith.constant 0 : index
    %1 = vector.load %arg2[%c0_1, %c0_2] : memref<32x128xf32, #tpu.memory_space<vmem>>, vector<32x128xf32>
    %cst = arith.constant dense<0.000000e+00> : vector<16x128xf32>
    %2 = tpu.matmul %0, %1, %cst {dimension_numbers = #tpu.dot_dimension_numbers<[1], [0], [0], [1], [0, 0, 1, 1], [], []>} : vector<16x32xf32>, vector<32x128xf32>, vector<16x128xf32> -> vector<16x128xf32>
    %c0_3 = arith.constant 0 : index
    %c0_4 = arith.constant 0 : index
    %3 = vector.load %arg3[%c0_3, %c0_4] : memref<1x128xf32, #tpu.memory_space<vmem>>, vector<1x128xf32>
    %4 = vector.broadcast %3 : vector<1x128xf32> to vector<16x128xf32>
    %5 = arith.addf %2, %4 : vector<16x128xf32>
    %c0_5 = arith.constant 0 : index
    %c0_6 = arith.constant 0 : index
    %c0_7 = arith.constant 0 : index
    %6 = vector.load %arg6[%c0_5, %c0_6, %c0_7] : memref<1x1x128xf32, #tpu.memory_space<vmem>>, vector<1x1x128xf32>
    %7 = vector.shape_cast %6 : vector<1x1x128xf32> to vector<1x128xf32>
    %c0_8 = arith.constant 0 : index
    %c0_9 = arith.constant 0 : index
    %c0_10 = arith.constant 0 : index
    %8 = vector.load %arg7[%c0_8, %c0_9, %c0_10] : memref<1x1x128xf32, #tpu.memory_space<vmem>>, vector<1x1x128xf32>
    %9 = vector.shape_cast %8 : vector<1x1x128xf32> to vector<1x128xf32>
    %cst_11 = arith.constant 6.250000e-02 : f32
    %10 = vector.broadcast %cst_11 : f32 to vector<1x128xf32>
    %11 = arith.mulf %9, %10 : vector<1x128xf32>
    %cst_12 = arith.constant 0.000000e+00 : f32
    %12 = vector.broadcast %cst_12 : f32 to vector<1x128xf32>
    %13 = arith.maximumf %11, %12 : vector<1x128xf32>
    %cst_13 = arith.constant 9.99999974E-6 : f32
    %14 = vector.broadcast %cst_13 : f32 to vector<1x128xf32>
    %15 = arith.addf %13, %14 : vector<1x128xf32>
    %16 = math.rsqrt %15 : vector<1x128xf32>
    %c0_14 = arith.constant 0 : index
    %c0_15 = arith.constant 0 : index
    %17 = vector.load %arg4[%c0_14, %c0_15] : memref<1x128xf32, #tpu.memory_space<vmem>>, vector<1x128xf32>
    %18 = vector.broadcast %7 : vector<1x128xf32> to vector<16x128xf32>
    %19 = arith.subf %5, %18 : vector<16x128xf32>
    %20 = vector.broadcast %17 : vector<1x128xf32> to vector<16x128xf32>
    %21 = arith.mulf %20, %19 : vector<16x128xf32>
    %22 = vector.broadcast %16 : vector<1x128xf32> to vector<16x128xf32>
    %23 = arith.mulf %21, %22 : vector<16x128xf32>
    %c0_16 = arith.constant 0 : index
    %c0_17 = arith.constant 0 : index
    %24 = vector.load %arg5[%c0_16, %c0_17] : memref<1x128xf32, #tpu.memory_space<vmem>>, vector<1x128xf32>
    %25 = vector.broadcast %24 : vector<1x128xf32> to vector<16x128xf32>
    %26 = arith.addf %23, %25 : vector<16x128xf32>
    %cst_18 = arith.constant 0.000000e+00 : f32
    %27 = vector.broadcast %cst_18 : f32 to vector<16x128xf32>
    %28 = arith.maximumf %26, %27 : vector<16x128xf32>
    %c0_19 = arith.constant 0 : index
    %c0_20 = arith.constant 0 : index
    %29 = vector.load %arg8[%c0_19, %c0_20] : memref<16x128xf32, #tpu.memory_space<vmem>>, vector<16x128xf32>
    tpu.vector_store %arg8[%c0_19, %c0_20], %28 {strides = array<i32>} : memref<16x128xf32, #tpu.memory_space<vmem>>, vector<16x128xf32>,
    return
  }
  func.func @transform_0(%arg0: i32) -> (i32, i32) {
    %c0_i32 = arith.constant 0 : i32
    %c0_i32_0 = arith.constant 0 : i32
    return %arg0, %c0_i32 : i32, i32
  }
  func.func @transform_1(%arg0: i32) -> (i32, i32) {
    %c0_i32 = arith.constant 0 : i32
    %c0_i32_0 = arith.constant 0 : i32
    %c0_i32_1 = arith.constant 0 : i32
    return %c0_i32, %c0_i32_0 : i32, i32
  }
  func.func @transform_2(%arg0: i32) -> (i32, i32) {
    %c0_i32 = arith.constant 0 : i32
    %c0_i32_0 = arith.constant 0 : i32
    %c0_i32_1 = arith.constant 0 : i32
    return %c0_i32, %c0_i32_0 : i32, i32
  }
  func.func @transform_3(%arg0: i32) -> (i32, i32) {
    %c0_i32 = arith.constant 0 : i32
    %c0_i32_0 = arith.constant 0 : i32
    %c0_i32_1 = arith.constant 0 : i32
    return %c0_i32, %c0_i32_0 : i32, i32
  }
  func.func @transform_4(%arg0: i32) -> (i32, i32) {
    %c0_i32 = arith.constant 0 : i32
    %c0_i32_0 = arith.constant 0 : i32
    %c0_i32_1 = arith.constant 0 : i32
    return %c0_i32, %c0_i32_0 : i32, i32
  }
  func.func @transform_5(%arg0: i32) -> (i32, i32, i32) {
    %c0_i32 = arith.constant 0 : i32
    %c0_i32_0 = arith.constant 0 : i32
    %c0_i32_1 = arith.constant 0 : i32
    %c0_i32_2 = arith.constant 0 : i32
    return %c0_i32, %c0_i32_0, %c0_i32_1 : i32, i32, i32
  }
  func.func @transform_6(%arg0: i32) -> (i32, i32, i32) {
    %c0_i32 = arith.constant 0 : i32
    %c0_i32_0 = arith.constant 0 : i32
    %c0_i32_1 = arith.constant 0 : i32
    %c0_i32_2 = arith.constant 0 : i32
    return %c0_i32, %c0_i32_0, %c0_i32_1 : i32, i32, i32
  }
  func.func @transform_7(%arg0: i32) -> (i32, i32) {
    %c0_i32 = arith.constant 0 : i32
    %c0_i32_0 = arith.constant 0 : i32
    return %arg0, %c0_i32 : i32, i32
  }
}

module attributes {stable_mosaic.version = 11 : i64} {
  func.func @interp_kernel(%arg0: i32, %arg1: i32, %arg2: memref<1x3x128xf32, #tpu.memory_space<vmem>>, %arg3: memref<1x16x3xf32, #tpu.memory_space<vmem>>, %arg4: memref<1x128x128xf32, #tpu.memory_space<vmem>>, %arg5: memref<1x16x128xf32, #tpu.memory_space<vmem>>, %arg6: memref<1x16x128xf32, #tpu.memory_space<vmem>>) attributes {dimension_semantics = [#tpu.dimension_semantics<parallel>, #tpu.dimension_semantics<parallel>], iteration_bounds = array<i64: 2, 1>, scalar_prefetch = 0 : i64, scratch_operands = 0 : i64, tpu.core_type = #tpu.core_type<tc>, window_params = [{transform_indices = @transform_0, window_bounds = array<i64: 1, 3, 128>}, {transform_indices = @transform_1, window_bounds = array<i64: 1, 16, 3>}, {transform_indices = @transform_2, window_bounds = array<i64: 1, 128, 128>}, {transform_indices = @transform_3, window_bounds = array<i64: 1, 16, 128>}, {transform_indices = @transform_4, window_bounds = array<i64: 1, 16, 128>}]} {
    %c0 = arith.constant 0 : index
    %c0_0 = arith.constant 0 : index
    %c0_1 = arith.constant 0 : index
    %0 = vector.load %arg3[%c0, %c0_0, %c0_1] : memref<1x16x3xf32, #tpu.memory_space<vmem>>, vector<1x16x3xf32>
    %1 = vector.shape_cast %0 : vector<1x16x3xf32> to vector<16x3xf32>
    %2 = vector.extract_strided_slice %1 {offsets = [0, 0], sizes = [16, 1], strides = [1, 1]} : vector<16x3xf32> to vector<16x1xf32>
    %3 = vector.extract_strided_slice %1 {offsets = [0, 1], sizes = [16, 1], strides = [1, 1]} : vector<16x3xf32> to vector<16x1xf32>
    %4 = vector.extract_strided_slice %1 {offsets = [0, 2], sizes = [16, 1], strides = [1, 1]} : vector<16x3xf32> to vector<16x1xf32>
    %c0_2 = arith.constant 0 : index
    %c0_3 = arith.constant 0 : index
    %c0_4 = arith.constant 0 : index
    %5 = vector.load %arg2[%c0_2, %c0_3, %c0_4] : memref<1x3x128xf32, #tpu.memory_space<vmem>>, vector<1x3x128xf32>
    %6 = vector.shape_cast %5 : vector<1x3x128xf32> to vector<3x128xf32>
    %cst = arith.constant 0.000000e+00 : f32
    %7 = vector.broadcast %cst : f32 to vector<16x128xf32>
    %8 = vector.extract_strided_slice %6 {offsets = [0, 0], sizes = [1, 128], strides = [1, 1]} : vector<3x128xf32> to vector<1x128xf32>
    %9 = vector.broadcast %2 : vector<16x1xf32> to vector<16x128xf32>
    %10 = vector.broadcast %8 : vector<1x128xf32> to vector<16x128xf32>
    %11 = arith.subf %9, %10 : vector<16x128xf32>
    %12 = arith.mulf %11, %11 : vector<16x128xf32>
    %13 = arith.addf %7, %12 : vector<16x128xf32>
    %14 = vector.extract_strided_slice %6 {offsets = [1, 0], sizes = [1, 128], strides = [1, 1]} : vector<3x128xf32> to vector<1x128xf32>
    %15 = vector.broadcast %3 : vector<16x1xf32> to vector<16x128xf32>
    %16 = vector.broadcast %14 : vector<1x128xf32> to vector<16x128xf32>
    %17 = arith.subf %15, %16 : vector<16x128xf32>
    %18 = arith.mulf %17, %17 : vector<16x128xf32>
    %19 = arith.addf %13, %18 : vector<16x128xf32>
    %20 = vector.extract_strided_slice %6 {offsets = [2, 0], sizes = [1, 128], strides = [1, 1]} : vector<3x128xf32> to vector<1x128xf32>
    %21 = vector.broadcast %4 : vector<16x1xf32> to vector<16x128xf32>
    %22 = vector.broadcast %20 : vector<1x128xf32> to vector<16x128xf32>
    %23 = arith.subf %21, %22 : vector<16x128xf32>
    %24 = arith.mulf %23, %23 : vector<16x128xf32>
    %25 = arith.addf %19, %24 : vector<16x128xf32>
    %26 = tpu.iota {dimensions = array<i32: 1>} : vector<1x128xi32>
    %c0_i32 = arith.constant 0 : i32
    %27 = vector.broadcast %c0_i32 : i32 to vector<1x128xi32>
    %28 = arith.addi %26, %27 : vector<1x128xi32>
    %cst_5 = arith.constant dense<0x7F800000> : vector<16xf32>
    %29 = vector.multi_reduction <minimumf>, %25, %cst_5 [1] : vector<16x128xf32> to vector<16xf32>
    %30 = vector.shape_cast %29 : vector<16xf32> to vector<16x1xf32>
    %31 = vector.broadcast %30 : vector<16x1xf32> to vector<16x128xf32>
    %32 = arith.cmpf oeq, %25, %31 : vector<16x128xf32>
    %c128_i32 = arith.constant 128 : i32
    %33 = vector.shape_cast %28 : vector<1x128xi32> to vector<1x128xi32>
    %34 = vector.broadcast %33 : vector<1x128xi32> to vector<16x128xi32>
    %35 = vector.broadcast %c128_i32 : i32 to vector<16x128xi32>
    %36 = arith.select %32, %34, %35 : vector<16x128xi1>, vector<16x128xi32>
    %cst_6 = arith.constant dense<2147483647> : vector<16xi32>
    %37 = vector.multi_reduction <minsi>, %36, %cst_6 [1] : vector<16x128xi32> to vector<16xi32>
    %38 = vector.shape_cast %37 : vector<16xi32> to vector<16x1xi32>
    %39 = vector.broadcast %28 : vector<1x128xi32> to vector<16x128xi32>
    %40 = vector.broadcast %38 : vector<16x1xi32> to vector<16x128xi32>
    %41 = arith.cmpi eq, %39, %40 : vector<16x128xi32>
    %cst_7 = arith.constant 3.000000e+38 : f32
    %42 = vector.broadcast %cst_7 : f32 to vector<16x128xf32>
    %43 = arith.select %41, %42, %25 : vector<16x128xi1>, vector<16x128xf32>
    %cst_8 = arith.constant dense<0x7F800000> : vector<16xf32>
    %44 = vector.multi_reduction <minimumf>, %43, %cst_8 [1] : vector<16x128xf32> to vector<16xf32>
    %45 = vector.shape_cast %44 : vector<16xf32> to vector<16x1xf32>
    %46 = vector.broadcast %45 : vector<16x1xf32> to vector<16x128xf32>
    %47 = arith.cmpf oeq, %43, %46 : vector<16x128xf32>
    %c128_i32_9 = arith.constant 128 : i32
    %48 = vector.shape_cast %28 : vector<1x128xi32> to vector<1x128xi32>
    %49 = vector.broadcast %48 : vector<1x128xi32> to vector<16x128xi32>
    %50 = vector.broadcast %c128_i32_9 : i32 to vector<16x128xi32>
    %51 = arith.select %47, %49, %50 : vector<16x128xi1>, vector<16x128xi32>
    %cst_10 = arith.constant dense<2147483647> : vector<16xi32>
    %52 = vector.multi_reduction <minsi>, %51, %cst_10 [1] : vector<16x128xi32> to vector<16xi32>
    %53 = vector.shape_cast %52 : vector<16xi32> to vector<16x1xi32>
    %54 = vector.broadcast %28 : vector<1x128xi32> to vector<16x128xi32>
    %55 = vector.broadcast %53 : vector<16x1xi32> to vector<16x128xi32>
    %56 = arith.cmpi eq, %54, %55 : vector<16x128xi32>
    %cst_11 = arith.constant 3.000000e+38 : f32
    %57 = vector.broadcast %cst_11 : f32 to vector<16x128xf32>
    %58 = arith.select %56, %57, %43 : vector<16x128xi1>, vector<16x128xf32>
    %cst_12 = arith.constant dense<0x7F800000> : vector<16xf32>
    %59 = vector.multi_reduction <minimumf>, %58, %cst_12 [1] : vector<16x128xf32> to vector<16xf32>
    %60 = vector.shape_cast %59 : vector<16xf32> to vector<16x1xf32>
    %61 = vector.broadcast %60 : vector<16x1xf32> to vector<16x128xf32>
    %62 = arith.cmpf oeq, %58, %61 : vector<16x128xf32>
    %c128_i32_13 = arith.constant 128 : i32
    %63 = vector.shape_cast %28 : vector<1x128xi32> to vector<1x128xi32>
    %64 = vector.broadcast %63 : vector<1x128xi32> to vector<16x128xi32>
    %65 = vector.broadcast %c128_i32_13 : i32 to vector<16x128xi32>
    %66 = arith.select %62, %64, %65 : vector<16x128xi1>, vector<16x128xi32>
    %cst_14 = arith.constant dense<2147483647> : vector<16xi32>
    %67 = vector.multi_reduction <minsi>, %66, %cst_14 [1] : vector<16x128xi32> to vector<16xi32>
    %68 = vector.shape_cast %67 : vector<16xi32> to vector<16x1xi32>
    %cst_15 = arith.constant 9.99999993E-9 : f32
    %69 = vector.broadcast %cst_15 : f32 to vector<16x1xf32>
    %70 = arith.addf %30, %69 : vector<16x1xf32>
    %cst_16 = arith.constant 1.000000e+00 : f32
    %71 = vector.broadcast %cst_16 : f32 to vector<16x1xf32>
    %72 = arith.divf %71, %70 : vector<16x1xf32>
    %cst_17 = arith.constant 9.99999993E-9 : f32
    %73 = vector.broadcast %cst_17 : f32 to vector<16x1xf32>
    %74 = arith.addf %45, %73 : vector<16x1xf32>
    %cst_18 = arith.constant 1.000000e+00 : f32
    %75 = vector.broadcast %cst_18 : f32 to vector<16x1xf32>
    %76 = arith.divf %75, %74 : vector<16x1xf32>
    %cst_19 = arith.constant 9.99999993E-9 : f32
    %77 = vector.broadcast %cst_19 : f32 to vector<16x1xf32>
    %78 = arith.addf %60, %77 : vector<16x1xf32>
    %cst_20 = arith.constant 1.000000e+00 : f32
    %79 = vector.broadcast %cst_20 : f32 to vector<16x1xf32>
    %80 = arith.divf %79, %78 : vector<16x1xf32>
    %81 = arith.addf %72, %76 : vector<16x1xf32>
    %82 = arith.addf %81, %80 : vector<16x1xf32>
    %cst_21 = arith.constant 0.000000e+00 : f32
    %83 = vector.broadcast %cst_21 : f32 to vector<16x128xf32>
    %84 = tpu.iota {dimensions = array<i32: 1>} : vector<1x128xi32>
    %c0_i32_22 = arith.constant 0 : i32
    %85 = vector.broadcast %c0_i32_22 : i32 to vector<1x128xi32>
    %86 = arith.addi %84, %85 : vector<1x128xi32>
    %cst_23 = arith.constant 0.000000e+00 : f32
    %87 = vector.broadcast %cst_23 : f32 to vector<16x128xf32>
    %88 = vector.broadcast %86 : vector<1x128xi32> to vector<16x128xi32>
    %89 = vector.broadcast %38 : vector<16x1xi32> to vector<16x128xi32>
    %90 = arith.cmpi eq, %88, %89 : vector<16x128xi32>
    %cst_24 = arith.constant 0.000000e+00 : f32
    %91 = vector.shape_cast %72 : vector<16x1xf32> to vector<16x1xf32>
    %92 = vector.broadcast %91 : vector<16x1xf32> to vector<16x128xf32>
    %93 = vector.broadcast %cst_24 : f32 to vector<16x128xf32>
    %94 = arith.select %90, %92, %93 : vector<16x128xi1>, vector<16x128xf32>
    %95 = arith.addf %87, %94 : vector<16x128xf32>
    %96 = vector.broadcast %86 : vector<1x128xi32> to vector<16x128xi32>
    %97 = vector.broadcast %53 : vector<16x1xi32> to vector<16x128xi32>
    %98 = arith.cmpi eq, %96, %97 : vector<16x128xi32>
    %cst_25 = arith.constant 0.000000e+00 : f32
    %99 = vector.shape_cast %76 : vector<16x1xf32> to vector<16x1xf32>
    %100 = vector.broadcast %99 : vector<16x1xf32> to vector<16x128xf32>
    %101 = vector.broadcast %cst_25 : f32 to vector<16x128xf32>
    %102 = arith.select %98, %100, %101 : vector<16x128xi1>, vector<16x128xf32>
    %103 = arith.addf %95, %102 : vector<16x128xf32>
    %104 = vector.broadcast %86 : vector<1x128xi32> to vector<16x128xi32>
    %105 = vector.broadcast %68 : vector<16x1xi32> to vector<16x128xi32>
    %106 = arith.cmpi eq, %104, %105 : vector<16x128xi32>
    %cst_26 = arith.constant 0.000000e+00 : f32
    %107 = vector.shape_cast %80 : vector<16x1xf32> to vector<16x1xf32>
    %108 = vector.broadcast %107 : vector<16x1xf32> to vector<16x128xf32>
    %109 = vector.broadcast %cst_26 : f32 to vector<16x128xf32>
    %110 = arith.select %106, %108, %109 : vector<16x128xi1>, vector<16x128xf32>
    %111 = arith.addf %103, %110 : vector<16x128xf32>
    %c0_27 = arith.constant 0 : index
    %c0_28 = arith.constant 0 : index
    %c0_29 = arith.constant 0 : index
    %112 = vector.load %arg4[%c0_27, %c0_28, %c0_29] : memref<1x128x128xf32, #tpu.memory_space<vmem>>, vector<1x128x128xf32>
    %113 = vector.shape_cast %112 : vector<1x128x128xf32> to vector<128x128xf32>
    %cst_30 = arith.constant dense<0.000000e+00> : vector<16x128xf32>
    %114 = tpu.matmul %111, %113, %cst_30 {dimension_numbers = #tpu.dot_dimension_numbers<[1], [0], [0], [1], [0, 0, 1, 1], [], []>} : vector<16x128xf32>, vector<128x128xf32>, vector<16x128xf32> -> vector<16x128xf32>
    %115 = arith.addf %83, %114 : vector<16x128xf32>
    %116 = vector.broadcast %82 : vector<16x1xf32> to vector<16x128xf32>
    %117 = arith.divf %115, %116 : vector<16x128xf32>
    %c0_31 = arith.constant 0 : index
    %c0_32 = arith.constant 0 : index
    %c0_33 = arith.constant 0 : index
    %118 = vector.load %arg5[%c0_31, %c0_32, %c0_33] : memref<1x16x128xf32, #tpu.memory_space<vmem>>, vector<1x16x128xf32>
    %119 = vector.shape_cast %118 : vector<1x16x128xf32> to vector<16x128xf32>
    %120 = arith.addf %117, %119 : vector<16x128xf32>
    %c0_34 = arith.constant 0 : index
    %c0_35 = arith.constant 0 : index
    %c0_36 = arith.constant 0 : index
    %121 = vector.load %arg6[%c0_34, %c0_35, %c0_36] : memref<1x16x128xf32, #tpu.memory_space<vmem>>, vector<1x16x128xf32>
    %122 = vector.shape_cast %121 : vector<1x16x128xf32> to vector<16x128xf32>
    %123 = vector.shape_cast %120 : vector<16x128xf32> to vector<1x16x128xf32>
    tpu.vector_store %arg6[%c0_34, %c0_35, %c0_36], %123 {strides = array<i32>} : memref<1x16x128xf32, #tpu.memory_space<vmem>>, vector<1x16x128xf32>,
    return
  }
  func.func @transform_0(%arg0: i32, %arg1: i32) -> (i32, i32, i32) {
    %c0_i32 = arith.constant 0 : i32
    %c0_i32_0 = arith.constant 0 : i32
    %c0_i32_1 = arith.constant 0 : i32
    return %arg0, %c0_i32, %c0_i32_0 : i32, i32, i32
  }
  func.func @transform_1(%arg0: i32, %arg1: i32) -> (i32, i32, i32) {
    %c0_i32 = arith.constant 0 : i32
    %c0_i32_0 = arith.constant 0 : i32
    return %arg0, %arg1, %c0_i32 : i32, i32, i32
  }
  func.func @transform_2(%arg0: i32, %arg1: i32) -> (i32, i32, i32) {
    %c0_i32 = arith.constant 0 : i32
    %c0_i32_0 = arith.constant 0 : i32
    %c0_i32_1 = arith.constant 0 : i32
    return %arg0, %c0_i32, %c0_i32_0 : i32, i32, i32
  }
  func.func @transform_3(%arg0: i32, %arg1: i32) -> (i32, i32, i32) {
    %c0_i32 = arith.constant 0 : i32
    %c0_i32_0 = arith.constant 0 : i32
    return %arg0, %arg1, %c0_i32 : i32, i32, i32
  }
  func.func @transform_4(%arg0: i32, %arg1: i32) -> (i32, i32, i32) {
    %c0_i32 = arith.constant 0 : i32
    %c0_i32_0 = arith.constant 0 : i32
    return %arg0, %arg1, %c0_i32 : i32, i32, i32
  }
}

</mosaic_0001>

<llo_original>
// kernel: transition_up.8
$region0: #{transition_up.8}
  #allocation0 [shape = 'u32[]', space=smem, size = 0x4, offset = 0x4, fixed_abs, tag = 'smem constant byte address 0x4 - core index']
  #allocation1 [shape = 'u32[144,128]{1,0:T(1,128)}', space=vmem, size = 0x12000, scoped, tag = 'internal scratch']
  %s0 = inlined_call_operand.vmem [shape: f32[32,16], index: 0, kind: input, shape index: {}]
  %s1 = inlined_call_operand.vmem [shape: f32[16,128], index: 1, kind: input, shape index: {}]
  %s2 = inlined_call_operand.vmem [shape: f32[1,128], index: 2, kind: input, shape index: {}]
  %s3 = inlined_call_operand.vmem [shape: f32[1,128], index: 3, kind: input, shape index: {}]
  %s4 = inlined_call_operand.vmem [shape: f32[1,128], index: 4, kind: input, shape index: {}]
  %s5 = inlined_call_operand.vmem [shape: f32[1,1,128], index: 5, kind: input, shape index: {}]
  %s6 = inlined_call_operand.vmem [shape: f32[1,1,128], index: 6, kind: input, shape index: {}]
  %s7 = inlined_call_operand.vmem [shape: f32[32,128], index: 7, kind: output, shape index: {}]
  %s8 = sld [smem:[#allocation0]]
  $region38: #{transition_up.8} parent=0
    _
  %s10 = ssub.s32 1, %s8
  %s11 = scalar_select 0, %s10, %s8
  // Predicated region
  $region2: #{transition_up.8} parent=0 // pred_check
    _
  $region3: #{transition_up.8} parent=0 // pred_check_branch
    %13 = sbr.rel (0) target = $region5
  $region4: #{transition_up.8} parent=0 // pred_region
    _
  $region5: #{transition_up.8} parent=0 // pred_fallthru
    _
  // Predicated region
  $region6: #{transition_up.8} parent=0 // pred_check
    _
  $region7: #{transition_up.8} parent=0 // pred_check_branch
    %15 = sbr.rel (0) target = $region9
  $region8: #{transition_up.8} parent=0 // pred_region
    _
  $region9: #{transition_up.8} parent=0 // pred_fallthru
    _
  // Predicated region
  $region10: #{transition_up.8} parent=0 // pred_check
    _
  $region11: #{transition_up.8} parent=0 // pred_check_branch
    %17 = sbr.rel (0) target = $region13
  $region12: #{transition_up.8} parent=0 // pred_region
    _
  $region13: #{transition_up.8} parent=0 // pred_fallthru
    _
  // Predicated region
  $region14: #{transition_up.8} parent=0 // pred_check
    _
  $region15: #{transition_up.8} parent=0 // pred_check_branch
    %19 = sbr.rel (0) target = $region17
  $region16: #{transition_up.8} parent=0 // pred_region
    _
  $region17: #{transition_up.8} parent=0 // pred_fallthru
    _
  // Predicated region
  $region18: #{transition_up.8} parent=0 // pred_check
    _
  $region19: #{transition_up.8} parent=0 // pred_check_branch
    %21 = sbr.rel (0) target = $region21
  $region20: #{transition_up.8} parent=0 // pred_region
    _
  $region21: #{transition_up.8} parent=0 // pred_fallthru
    _
  // Predicated region
  $region22: #{transition_up.8} parent=0 // pred_check
    _
  $region23: #{transition_up.8} parent=0 // pred_check_branch
    %23 = sbr.rel (0) target = $region25
  $region24: #{transition_up.8} parent=0 // pred_region
    _
  $region25: #{transition_up.8} parent=0 // pred_fallthru
    _
  // Predicated region
  $region26: #{transition_up.8} parent=0 // pred_check
    _
  $region27: #{transition_up.8} parent=0 // pred_check_branch
    %25 = sbr.rel (0) target = $region29
  $region28: #{transition_up.8} parent=0 // pred_region
    _
  $region29: #{transition_up.8} parent=0 // pred_fallthru
    _
  %v26 = vld [vmem:[%s0] sm:$0xff]
  %v27 = vld [vmem:[%s0 + $0x8] sm:$0xff]
  %v28 = vld [vmem:[%s0 + $0x10] sm:$0xff]
  %v29 = vld [vmem:[%s0 + $0x18] sm:$0xff]
  %v30 = vld [vmem:[%s1] sm:$0xff]
  %v31 = vld [vmem:[%s1 + $0x8] sm:$0xff]
  %v32 = vld [vmem:[%s2] sm:$0x1]
  %v34 = vlaneseq
  %v35 = vshrl.u32 %v34, 7
  %v36 = vsub.s32 0, %v35
  %v37 = vrot.slane %v32, %v36
  %vm39 = vcmask 130048
  %v41 = vsel %vm39, %v26, 0
  %v44 = vsel %vm39, %v27, 0
  %v47 = vsel %vm39, %v28, 0
  %v50 = vsel %vm39, %v29, 0
  %52 = vmatprep.subr.mxu0 0.0
  %53 = vmatpush1.msra.mxu0 0.0
  %54 = vmatprep.subr.mxu0 0.0
  %55 = vmatpush1.msra.mxu0 0.0
  %56 = vmatprep.subr.mxu0 0.0
  %57 = vmatpush1.msra.mxu0 0.0
  %58 = vmatprep.subr.mxu0 0.0
  %59 = vmatpush1.msra.mxu0 0.0
  %60 = vmatprep.subr.mxu0 0.0
  %61 = vmatpush1.msra.mxu0 0.0
  %62 = vmatprep.subr.mxu0 0.0
  %63 = vmatpush1.msra.mxu0 0.0
  %64 = vmatprep.subr.mxu0 0.0
  %65 = vmatpush1.msra.mxu0 0.0
  %66 = vmatprep.subr.mxu0 0.0
  %67 = vmatpush1.msra.mxu0 0.0
  %68 = vmatprep.subr.mxu0 0.0
  %69 = vmatpush1.msra.mxu0 0.0
  %70 = vmatprep.subr.mxu0 0.0
  %71 = vmatpush1.msra.mxu0 0.0
  %72 = vmatprep.subr.mxu0 0.0
  %73 = vmatpush1.msra.mxu0 0.0
  %74 = vmatprep.subr.mxu0 0.0
  %75 = vmatpush1.msra.mxu0 0.0
  %76 = vmatprep.subr.mxu0 0.0
  %77 = vmatpush1.msra.mxu0 0.0
  %78 = vmatprep.subr.mxu0 0.0
  %79 = vmatpush1.msra.mxu0 0.0
  %80 = vmatprep.subr.mxu0 0.0
  %81 = vmatpush1.msra.mxu0 %v31
  %82 = vmatprep.subr.mxu0 0.0
  %83 = vmatpush1.msra.mxu0 %v30
  %84 = vmatprep.subr.mxu0 0.0
  %85 = vmatpush2.msra.mxu0 0.0
  %86 = vmatprep.subr.mxu0 0.0
  %87 = vmatpush2.msra.mxu0 0.0
  %88 = vmatprep.subr.mxu0 0.0
  %89 = vmatpush2.msra.mxu0 0.0
  %90 = vmatprep.subr.mxu0 0.0
  %91 = vmatpush2.msra.mxu0 0.0
  %92 = vmatprep.subr.mxu0 0.0
  %93 = vmatpush2.msra.mxu0 0.0
  %94 = vmatprep.subr.mxu0 0.0
  %95 = vmatpush2.msra.mxu0 0.0
  %96 = vmatprep.subr.mxu0 0.0
  %97 = vmatpush2.msra.mxu0 0.0
  %98 = vmatprep.subr.mxu0 0.0
  %99 = vmatpush2.msra.mxu0 0.0
  %100 = vmatprep.subr.mxu0 0.0
  %101 = vmatpush2.msra.mxu0 0.0
  %102 = vmatprep.subr.mxu0 0.0
  %103 = vmatpush2.msra.mxu0 0.0
  %104 = vmatprep.subr.mxu0 0.0
  %105 = vmatpush2.msra.mxu0 0.0
  %106 = vmatprep.subr.mxu0 0.0
  %107 = vmatpush2.msra.mxu0 0.0
  %108 = vmatprep.subr.mxu0 0.0
  %109 = vmatpush2.msra.mxu0 0.0
  %110 = vmatprep.subr.mxu0 0.0
  %111 = vmatpush2.msra.mxu0 0.0
  %112 = vmatprep.subr.mxu0 0.0
  %113 = vmatpush2.msra.mxu0 0.0
  %114 = vmatprep.subr.mxu0 0.0
  %115 = vmatpush2.msra.mxu0 0.0
  %116 = vmatprep.mubr.f32.mxu0 0.0
  %117 = vmatmul.mubr.f32.gmra.mxu0 %v41
  %v118 = vpop.f32.mrf.mxu0
  %v119 = vadd.f32 %v37, %v118
  %v120 = vpop.f32.mrf.mxu0
  %121 = vmatprep.mubr.f32.mxu0 0.0
  %122 = vmatmul.mubr.f32.gmra.mxu0 %v44
  %v123 = vpop.f32.mrf.mxu0
  %v124 = vadd.f32 %v37, %v123
  %v125 = vpop.f32.mrf.mxu0
  %126 = vmatprep.mubr.f32.mxu0 0.0
  %127 = vmatmul.mubr.f32.gmra.mxu0 %v47
  %v128 = vpop.f32.mrf.mxu0
  %v129 = vadd.f32 %v37, %v128
  %v130 = vpop.f32.mrf.mxu0
  %131 = vmatprep.mubr.f32.mxu0 0.0
  %132 = vmatmul.mubr.f32.gmra.mxu0 %v50
  %v133 = vpop.f32.mrf.mxu0
  %v134 = vadd.f32 %v37, %v133
  %v135 = vpop.f32.mrf.mxu0
  %136 = vdwg.mxu0
  %v137 = vld [vmem:[%s5] sm:$0x1]
  %v138 = vld [vmem:[%s6] sm:$0x1]
  %v139 = vmul.f32 %v138, 0.03125
  %v140 = vmax.f32 %v139, 0.0
  %v141 = vadd.f32 %v140, 1e-05
  %v142 = vrsqrt.pop %v141
  %v143 = vld [vmem:[%s3] sm:$0x1]
  %v145 = vlaneseq
  %v146 = vshrl.u32 %v145, 7
  %v147 = vsub.s32 0, %v146
  %v148 = vrot.slane %v137, %v147
  %v150 = vsub.f32 %v119, %v148
  %v151 = vsub.f32 %v124, %v148
  %v152 = vsub.f32 %v129, %v148
  %v153 = vsub.f32 %v134, %v148
  %v155 = vlaneseq
  %v156 = vshrl.u32 %v155, 7
  %v157 = vsub.s32 0, %v156
  %v158 = vrot.slane %v143, %v157
  %v160 = vmul.f32 %v158, %v150
  %v161 = vmul.f32 %v158, %v151
  %v162 = vmul.f32 %v158, %v152
  %v163 = vmul.f32 %v158, %v153
  %v165 = vlaneseq
  %v166 = vshrl.u32 %v165, 7
  %v167 = vsub.s32 0, %v166
  %v168 = vrot.slane %v142, %v167
  %v170 = vmul.f32 %v160, %v168
  %v171 = vmul.f32 %v161, %v168
  %v172 = vmul.f32 %v162, %v168
  %v173 = vmul.f32 %v163, %v168
  %v174 = vld [vmem:[%s4] sm:$0x1]
  %v176 = vlaneseq
  %v177 = vshrl.u32 %v176, 7
  %v178 = vsub.s32 0, %v177
  %v179 = vrot.slane %v174, %v178
  %v181 = vadd.f32 %v170, %v179
  %v182 = vadd.f32 %v171, %v179
  %v183 = vadd.f32 %v172, %v179
  %v184 = vadd.f32 %v173, %v179
  %v185 = vmax.f32 %v181, 0.0
  %v186 = vmax.f32 %v182, 0.0
  %v187 = vmax.f32 %v183, 0.0
  %v188 = vmax.f32 %v184, 0.0
  %189 = vst [vmem:[%s7] sm:$0xff] %v185
  %190 = vst [vmem:[%s7 + $0x8] sm:$0xff] %v186
  %191 = vst [vmem:[%s7 + $0x10] sm:$0xff] %v187
  %192 = vst [vmem:[%s7 + $0x18] sm:$0xff] %v188
  // Predicated region
  $region30: #{transition_up.8} parent=0 // pred_check
    _
  $region31: #{transition_up.8} parent=0 // pred_check_branch
    %194 = sbr.rel (0) target = $region33
  $region32: #{transition_up.8} parent=0 // pred_region
    _
  $region33: #{transition_up.8} parent=0 // pred_fallthru
    _
  // Predicated region
  $region34: #{transition_up.8} parent=0 // pred_check
    _
  $region35: #{transition_up.8} parent=0 // pred_check_branch
    %196 = sbr.rel (0) target = $region37
  $region36: #{transition_up.8} parent=0 // pred_region
    _
  $region37: #{transition_up.8} parent=0 // pred_fallthru
    _

// kernel: transition_up.7
$region0: #{transition_up.7}
  #allocation0 [shape = 'u32[]', space=smem, size = 0x4, offset = 0x4, fixed_abs, tag = 'smem constant byte address 0x4 - core index']
  #allocation1 [shape = 'u32[144,128]{1,0:T(1,128)}', space=vmem, size = 0x12000, scoped, tag = 'internal scratch']
  %s0 = inlined_call_operand.vmem [shape: f32[32,16], index: 0, kind: input, shape index: {}]
  %s1 = inlined_call_operand.vmem [shape: f32[16,128], index: 1, kind: input, shape index: {}]
  %s2 = inlined_call_operand.vmem [shape: f32[1,128], index: 2, kind: input, shape index: {}]
  %s3 = inlined_call_operand.vmem [shape: f32[1,1,128], index: 3, kind: output, shape index: {0}]
  %s4 = inlined_call_operand.vmem [shape: f32[1,1,128], index: 4, kind: output, shape index: {1}]
  %5 = xla_tuple %s3, %s4
  %s6 = sld [smem:[#allocation0]]
  $region38: #{transition_up.7} parent=0
    _
  %s8 = ssub.s32 1, %s6
  %s9 = scalar_select 0, %s8, %s6
  // Predicated region
  $region2: #{transition_up.7} parent=0 // pred_check
    _
  $region3: #{transition_up.7} parent=0 // pred_check_branch
    %11 = sbr.rel (0) target = $region5
  $region4: #{transition_up.7} parent=0 // pred_region
    %s12 = sadd.s32 0, 0
    %s13 = smul.u32 4, %s12
    %p14 = scmp.lt.s32.totalorder %s13, 3
    %s15 = scalar_select %p14, %s13, 3
    %s16 = smul.addr %s15, 8
    %s17 = scalar_lea.vmem %s0, %s16
    %s18 = sadd.s32 0, 0
    %s19 = smul.u32 4, %s18
  $region5: #{transition_up.7} parent=0 // pred_fallthru
    _
  // Predicated region
  $region6: #{transition_up.7} parent=0 // pred_check
    _
  $region7: #{transition_up.7} parent=0 // pred_check_branch
    %21 = sbr.rel (0) target = $region9
  $region8: #{transition_up.7} parent=0 // pred_region
    _
  $region9: #{transition_up.7} parent=0 // pred_fallthru
    _
  // Predicated region
  $region10: #{transition_up.7} parent=0 // pred_check
    _
  $region11: #{transition_up.7} parent=0 // pred_check_branch
    %23 = sbr.rel (0) target = $region13
  $region12: #{transition_up.7} parent=0 // pred_region
    _
  $region13: #{transition_up.7} parent=0 // pred_fallthru
    _
  %s24 = sadd.s32 0, 0
  %s25 = smul.u32 4, %s24
  %p26 = scmp.lt.s32.totalorder %s25, 3
  %s27 = scalar_select %p26, %s25, 3
  %s28 = smul.addr %s27, 8
  %s29 = scalar_lea.vmem %s0, %s28
  %s30 = sadd.s32 0, 0
  %s31 = smul.u32 4, %s30
  %p32 = scmp.lt.s32.totalorder %s31, 3
  %s33 = scalar_select %p32, %s31, 3
  %s34 = smul.addr %s33, 8
  %s35 = scalar_lea.vmem %s0, %s34
  %s36 = sadd.s32 0, 0
  %s37 = smul.u32 4, %s36
  %v38 = vld [vmem:[%s35] sm:$0xff]
  %v39 = vld [vmem:[%s35 + $0x8] sm:$0xff]
  %v40 = vld [vmem:[%s35 + $0x10] sm:$0xff]
  %v41 = vld [vmem:[%s35 + $0x18] sm:$0xff]
  %v42 = vld [vmem:[%s1] sm:$0xff]
  %v43 = vld [vmem:[%s1 + $0x8] sm:$0xff]
  %v44 = vld [vmem:[%s2] sm:$0x1]
  %v46 = vlaneseq
  %v47 = vshrl.u32 %v46, 7
  %v48 = vsub.s32 0, %v47
  %v49 = vrot.slane %v44, %v48
  %vm51 = vcmask 130048
  %v53 = vsel %vm51, %v38, 0
  %v56 = vsel %vm51, %v39, 0
  %v59 = vsel %vm51, %v40, 0
  %v62 = vsel %vm51, %v41, 0
  %64 = vmatprep.subr.mxu0 0.0
  %65 = vmatpush1.msra.mxu0 0.0
  %66 = vmatprep.subr.mxu0 0.0
  %67 = vmatpush1.msra.mxu0 0.0
  %68 = vmatprep.subr.mxu0 0.0
  %69 = vmatpush1.msra.mxu0 0.0
  %70 = vmatprep.subr.mxu0 0.0
  %71 = vmatpush1.msra.mxu0 0.0
  %72 = vmatprep.subr.mxu0 0.0
  %73 = vmatpush1.msra.mxu0 0.0
  %74 = vmatprep.subr.mxu0 0.0
  %75 = vmatpush1.msra.mxu0 0.0
  %76 = vmatprep.subr.mxu0 0.0
  %77 = vmatpush1.msra.mxu0 0.0
  %78 = vmatprep.subr.mxu0 0.0
  %79 = vmatpush1.msra.mxu0 0.0
  %80 = vmatprep.subr.mxu0 0.0
  %81 = vmatpush1.msra.mxu0 0.0
  %82 = vmatprep.subr.mxu0 0.0
  %83 = vmatpush1.msra.mxu0 0.0
  %84 = vmatprep.subr.mxu0 0.0
  %85 = vmatpush1.msra.mxu0 0.0
  %86 = vmatprep.subr.mxu0 0.0
  %87 = vmatpush1.msra.mxu0 0.0
  %88 = vmatprep.subr.mxu0 0.0
  %89 = vmatpush1.msra.mxu0 0.0
  %90 = vmatprep.subr.mxu0 0.0
  %91 = vmatpush1.msra.mxu0 0.0
  %92 = vmatprep.subr.mxu0 0.0
  %93 = vmatpush1.msra.mxu0 %v43
  %94 = vmatprep.subr.mxu0 0.0
  %95 = vmatpush1.msra.mxu0 %v42
  %96 = vmatprep.subr.mxu0 0.0
  %97 = vmatpush2.msra.mxu0 0.0
  %98 = vmatprep.subr.mxu0 0.0
  %99 = vmatpush2.msra.mxu0 0.0
  %100 = vmatprep.subr.mxu0 0.0
  %101 = vmatpush2.msra.mxu0 0.0
  %102 = vmatprep.subr.mxu0 0.0
  %103 = vmatpush2.msra.mxu0 0.0
  %104 = vmatprep.subr.mxu0 0.0
  %105 = vmatpush2.msra.mxu0 0.0
  %106 = vmatprep.subr.mxu0 0.0
  %107 = vmatpush2.msra.mxu0 0.0
  %108 = vmatprep.subr.mxu0 0.0
  %109 = vmatpush2.msra.mxu0 0.0
  %110 = vmatprep.subr.mxu0 0.0
  %111 = vmatpush2.msra.mxu0 0.0
  %112 = vmatprep.subr.mxu0 0.0
  %113 = vmatpush2.msra.mxu0 0.0
  %114 = vmatprep.subr.mxu0 0.0
  %115 = vmatpush2.msra.mxu0 0.0
  %116 = vmatprep.subr.mxu0 0.0
  %117 = vmatpush2.msra.mxu0 0.0
  %118 = vmatprep.subr.mxu0 0.0
  %119 = vmatpush2.msra.mxu0 0.0
  %120 = vmatprep.subr.mxu0 0.0
  %121 = vmatpush2.msra.mxu0 0.0
  %122 = vmatprep.subr.mxu0 0.0
  %123 = vmatpush2.msra.mxu0 0.0
  %124 = vmatprep.subr.mxu0 0.0
  %125 = vmatpush2.msra.mxu0 0.0
  %126 = vmatprep.subr.mxu0 0.0
  %127 = vmatpush2.msra.mxu0 0.0
  %128 = vmatprep.mubr.f32.mxu0 0.0
  %129 = vmatmul.mubr.f32.gmra.mxu0 %v53
  %v130 = vpop.f32.mrf.mxu0
  %v131 = vadd.f32 %v49, %v130
  %v132 = vpop.f32.mrf.mxu0
  %133 = vmatprep.mubr.f32.mxu0 0.0
  %134 = vmatmul.mubr.f32.gmra.mxu0 %v56
  %v135 = vpop.f32.mrf.mxu0
  %v136 = vadd.f32 %v49, %v135
  %v137 = vpop.f32.mrf.mxu0
  %138 = vmatprep.mubr.f32.mxu0 0.0
  %139 = vmatmul.mubr.f32.gmra.mxu0 %v59
  %v140 = vpop.f32.mrf.mxu0
  %v141 = vadd.f32 %v49, %v140
  %v142 = vpop.f32.mrf.mxu0
  %143 = vmatprep.mubr.f32.mxu0 0.0
  %144 = vmatmul.mubr.f32.gmra.mxu0 %v62
  %v145 = vpop.f32.mrf.mxu0
  %v146 = vadd.f32 %v49, %v145
  %v147 = vpop.f32.mrf.mxu0
  %148 = vdwg.mxu0
  %v149 = vadd.f32 %v131, %v136
  %v150 = vadd.f32 %v149, %v141
  %v151 = vadd.f32 %v150, %v146
  %v152 = vrot.slane %v151, 4
  %v153 = vadd.f32 %v151, %v152
  %v154 = vrot.slane %v153, 2
  %v155 = vadd.f32 %v153, %v154
  %v156 = vrot.slane %v155, 1
  %v157 = vadd.f32 %v155, %v156
  %v158 = vmul.f32 %v157, 0.03125
  %v159 = vsub.f32 %v131, %v158
  %v160 = vsub.f32 %v136, %v158
  %v161 = vsub.f32 %v141, %v158
  %v162 = vsub.f32 %v146, %v158
  %v163 = vmul.f32 %v159, %v159
  %v164 = vmul.f32 %v160, %v160
  %v165 = vmul.f32 %v161, %v161
  %v166 = vmul.f32 %v162, %v162
  %v167 = vadd.f32 %v163, %v164
  %v168 = vadd.f32 %v167, %v165
  %v169 = vadd.f32 %v168, %v166
  %v170 = vrot.slane %v169, 4
  %v171 = vadd.f32 %v169, %v170
  %v172 = vrot.slane %v171, 2
  %v173 = vadd.f32 %v171, %v172
  %v174 = vrot.slane %v173, 1
  %v175 = vadd.f32 %v173, %v174
  %p176 = scmp.eq.s32.totalorder 0, 0
  // Predicated region
  $region14: #{transition_up.7} parent=0 // pred_check
    %p177 = pneg %p176
  $region15: #{transition_up.7} parent=0 // pred_check_branch
    %179 = sbr.rel (%p177) target = $region17
  $region16: #{transition_up.7} parent=0 // pred_region
    %180 = vst [vmem:[%s3] sm:$0x1] %v158
    %181 = vst [vmem:[%s4] sm:$0x1] %v175
  $region17: #{transition_up.7} parent=0 // pred_fallthru
    _
  %p182 = scmp.gt.s32.totalorder 0, 0
  // Predicated region
  $region18: #{transition_up.7} parent=0 // pred_check
    %p183 = pneg %p182
  $region19: #{transition_up.7} parent=0 // pred_check_branch
    %185 = sbr.rel (%p183) target = $region21
  $region20: #{transition_up.7} parent=0 // pred_region
    %s186 = smul.u32 0, 32
    %s187 = scvt.s32.f32 %s186
    %s188 = sadd.f32 %s187, 32.0
    %v189 = vld [vmem:[%s3] sm:$0x1]
    %v190 = vsub.f32 %v158, %v189
    %v191 = vstv %s188
    %v192 = vrcp.pop %v191
    %s193 = vtos %v192
    %s194 = smul.f32 32.0, %s193
    %v195 = vstv %s194
    %v196 = vmul.f32 %v190, %v195
    %v197 = vadd.f32 %v189, %v196
    %198 = vst [vmem:[%s3] sm:$0x1] %v197
    %v199 = vld [vmem:[%s4] sm:$0x1]
    %v200 = vadd.f32 %v199, %v175
    %v201 = vmul.f32 %v190, %v190
    %s202 = smul.f32 %s187, 32.0
    %v203 = vstv %s188
    %v204 = vrcp.pop %v203
    %s205 = vtos %v204
    %s206 = smul.f32 %s202, %s205
    %v207 = vstv %s206
    %v208 = vmul.f32 %v201, %v207
    %v209 = vadd.f32 %v200, %v208
    %210 = vst [vmem:[%s4] sm:$0x1] %v209
  $region21: #{transition_up.7} parent=0 // pred_fallthru
    _
  // Predicated region
  $region22: #{transition_up.7} parent=0 // pred_check
    _
  $region23: #{transition_up.7} parent=0 // pred_check_branch
    %212 = sbr.rel (0) target = $region25
  $region24: #{transition_up.7} parent=0 // pred_region
    _
  $region25: #{transition_up.7} parent=0 // pred_fallthru
    _
  // Predicated region
  $region26: #{transition_up.7} parent=0 // pred_check
    _
  $region27: #{transition_up.7} parent=0 // pred_check_branch
    %214 = sbr.rel (0) target = $region29
  $region28: #{transition_up.7} parent=0 // pred_region
    _
  $region29: #{transition_up.7} parent=0 // pred_fallthru
    _
  // Predicated region
  $region30: #{transition_up.7} parent=0 // pred_check
    _
  $region31: #{transition_up.7} parent=0 // pred_check_branch
    %216 = sbr.rel (0) target = $region33
  $region32: #{transition_up.7} parent=0 // pred_region
    _
  $region33: #{transition_up.7} parent=0 // pred_fallthru
    _
  // Predicated region
  $region34: #{transition_up.7} parent=0 // pred_check
    _
  $region35: #{transition_up.7} parent=0 // pred_check_branch
    %218 = sbr.rel (0) target = $region37
  $region36: #{transition_up.7} parent=0 // pred_region
    _
  $region37: #{transition_up.7} parent=0 // pred_fallthru
    _

// kernel: transition_up.6
$region0: #{transition_up.6}
  #allocation0 [shape = 'u32[]', space=smem, size = 0x4, offset = 0x4, fixed_abs, tag = 'smem constant byte address 0x4 - core index']
  #allocation1 [shape = 'u32[144,128]{1,0:T(1,128)}', space=vmem, size = 0x12000, scoped, tag = 'internal scratch']
  %s0 = inlined_call_operand.vmem [shape: f32[16,32], index: 0, kind: input, shape index: {}]
  %s1 = inlined_call_operand.vmem [shape: f32[32,128], index: 1, kind: input, shape index: {}]
  %s2 = inlined_call_operand.vmem [shape: f32[1,128], index: 2, kind: input, shape index: {}]
  %s3 = inlined_call_operand.vmem [shape: f32[1,128], index: 3, kind: input, shape index: {}]
  %s4 = inlined_call_operand.vmem [shape: f32[1,128], index: 4, kind: input, shape index: {}]
  %s5 = inlined_call_operand.vmem [shape: f32[1,1,128], index: 5, kind: input, shape index: {}]
  %s6 = inlined_call_operand.vmem [shape: f32[1,1,128], index: 6, kind: input, shape index: {}]
  %s7 = inlined_call_operand.vmem [shape: f32[16,128], index: 7, kind: output, shape index: {}]
  %s8 = sld [smem:[#allocation0]]
  $region38: #{transition_up.6} parent=0
    _
  %s10 = ssub.s32 1, %s8
  %s11 = scalar_select 0, %s10, %s8
  // Predicated region
  $region2: #{transition_up.6} parent=0 // pred_check
    _
  $region3: #{transition_up.6} parent=0 // pred_check_branch
    %13 = sbr.rel (0) target = $region5
  $region4: #{transition_up.6} parent=0 // pred_region
    _
  $region5: #{transition_up.6} parent=0 // pred_fallthru
    _
  // Predicated region
  $region6: #{transition_up.6} parent=0 // pred_check
    _
  $region7: #{transition_up.6} parent=0 // pred_check_branch
    %15 = sbr.rel (0) target = $region9
  $region8: #{transition_up.6} parent=0 // pred_region
    _
  $region9: #{transition_up.6} parent=0 // pred_fallthru
    _
  // Predicated region
  $region10: #{transition_up.6} parent=0 // pred_check
    _
  $region11: #{transition_up.6} parent=0 // pred_check_branch
    %17 = sbr.rel (0) target = $region13
  $region12: #{transition_up.6} parent=0 // pred_region
    _
  $region13: #{transition_up.6} parent=0 // pred_fallthru
    _
  // Predicated region
  $region14: #{transition_up.6} parent=0 // pred_check
    _
  $region15: #{transition_up.6} parent=0 // pred_check_branch
    %19 = sbr.rel (0) target = $region17
  $region16: #{transition_up.6} parent=0 // pred_region
    _
  $region17: #{transition_up.6} parent=0 // pred_fallthru
    _
  // Predicated region
  $region18: #{transition_up.6} parent=0 // pred_check
    _
  $region19: #{transition_up.6} parent=0 // pred_check_branch
    %21 = sbr.rel (0) target = $region21
  $region20: #{transition_up.6} parent=0 // pred_region
    _
  $region21: #{transition_up.6} parent=0 // pred_fallthru
    _
  // Predicated region
  $region22: #{transition_up.6} parent=0 // pred_check
    _
  $region23: #{transition_up.6} parent=0 // pred_check_branch
    %23 = sbr.rel (0) target = $region25
  $region24: #{transition_up.6} parent=0 // pred_region
    _
  $region25: #{transition_up.6} parent=0 // pred_fallthru
    _
  // Predicated region
  $region26: #{transition_up.6} parent=0 // pred_check
    _
  $region27: #{transition_up.6} parent=0 // pred_check_branch
    %25 = sbr.rel (0) target = $region29
  $region28: #{transition_up.6} parent=0 // pred_region
    _
  $region29: #{transition_up.6} parent=0 // pred_fallthru
    _
  %v26 = vld [vmem:[%s0] sm:$0xff]
  %v27 = vld [vmem:[%s0 + $0x8] sm:$0xff]
  %v28 = vld [vmem:[%s1] sm:$0xff]
  %v29 = vld [vmem:[%s1 + $0x8] sm:$0xff]
  %v30 = vld [vmem:[%s1 + $0x10] sm:$0xff]
  %v31 = vld [vmem:[%s1 + $0x18] sm:$0xff]
  %v32 = vld [vmem:[%s2] sm:$0x1]
  %v34 = vlaneseq
  %v35 = vshrl.u32 %v34, 7
  %v36 = vsub.s32 0, %v35
  %v37 = vrot.slane %v32, %v36
  %vm39 = vcmask 261120
  %v41 = vsel %vm39, %v26, 0
  %v44 = vsel %vm39, %v27, 0
  %46 = vmatprep.subr.mxu0 0.0
  %47 = vmatpush1.msra.mxu0 0.0
  %48 = vmatprep.subr.mxu0 0.0
  %49 = vmatpush1.msra.mxu0 0.0
  %50 = vmatprep.subr.mxu0 0.0
  %51 = vmatpush1.msra.mxu0 0.0
  %52 = vmatprep.subr.mxu0 0.0
  %53 = vmatpush1.msra.mxu0 0.0
  %54 = vmatprep.subr.mxu0 0.0
  %55 = vmatpush1.msra.mxu0 0.0
  %56 = vmatprep.subr.mxu0 0.0
  %57 = vmatpush1.msra.mxu0 0.0
  %58 = vmatprep.subr.mxu0 0.0
  %59 = vmatpush1.msra.mxu0 0.0
  %60 = vmatprep.subr.mxu0 0.0
  %61 = vmatpush1.msra.mxu0 0.0
  %62 = vmatprep.subr.mxu0 0.0
  %63 = vmatpush1.msra.mxu0 0.0
  %64 = vmatprep.subr.mxu0 0.0
  %65 = vmatpush1.msra.mxu0 0.0
  %66 = vmatprep.subr.mxu0 0.0
  %67 = vmatpush1.msra.mxu0 0.0
  %68 = vmatprep.subr.mxu0 0.0
  %69 = vmatpush1.msra.mxu0 0.0
  %70 = vmatprep.subr.mxu0 0.0
  %71 = vmatpush1.msra.mxu0 %v31
  %72 = vmatprep.subr.mxu0 0.0
  %73 = vmatpush1.msra.mxu0 %v30
  %74 = vmatprep.subr.mxu0 0.0
  %75 = vmatpush1.msra.mxu0 %v29
  %76 = vmatprep.subr.mxu0 0.0
  %77 = vmatpush1.msra.mxu0 %v28
  %78 = vmatprep.subr.mxu0 0.0
  %79 = vmatpush2.msra.mxu0 0.0
  %80 = vmatprep.subr.mxu0 0.0
  %81 = vmatpush2.msra.mxu0 0.0
  %82 = vmatprep.subr.mxu0 0.0
  %83 = vmatpush2.msra.mxu0 0.0
  %84 = vmatprep.subr.mxu0 0.0
  %85 = vmatpush2.msra.mxu0 0.0
  %86 = vmatprep.subr.mxu0 0.0
  %87 = vmatpush2.msra.mxu0 0.0
  %88 = vmatprep.subr.mxu0 0.0
  %89 = vmatpush2.msra.mxu0 0.0
  %90 = vmatprep.subr.mxu0 0.0
  %91 = vmatpush2.msra.mxu0 0.0
  %92 = vmatprep.subr.mxu0 0.0
  %93 = vmatpush2.msra.mxu0 0.0
  %94 = vmatprep.subr.mxu0 0.0
  %95 = vmatpush2.msra.mxu0 0.0
  %96 = vmatprep.subr.mxu0 0.0
  %97 = vmatpush2.msra.mxu0 0.0
  %98 = vmatprep.subr.mxu0 0.0
  %99 = vmatpush2.msra.mxu0 0.0
  %100 = vmatprep.subr.mxu0 0.0
  %101 = vmatpush2.msra.mxu0 0.0
  %102 = vmatprep.subr.mxu0 0.0
  %103 = vmatpush2.msra.mxu0 0.0
  %104 = vmatprep.subr.mxu0 0.0
  %105 = vmatpush2.msra.mxu0 0.0
  %106 = vmatprep.subr.mxu0 0.0
  %107 = vmatpush2.msra.mxu0 0.0
  %108 = vmatprep.subr.mxu0 0.0
  %109 = vmatpush2.msra.mxu0 0.0
  %110 = vmatprep.mubr.f32.mxu0 0.0
  %111 = vmatmul.mubr.f32.gmra.mxu0 %v41
  %v112 = vpop.f32.mrf.mxu0
  %v113 = vadd.f32 %v37, %v112
  %v114 = vpop.f32.mrf.mxu0
  %115 = vmatprep.mubr.f32.mxu0 0.0
  %116 = vmatmul.mubr.f32.gmra.mxu0 %v44
  %v117 = vpop.f32.mrf.mxu0
  %v118 = vadd.f32 %v37, %v117
  %v119 = vpop.f32.mrf.mxu0
  %120 = vdwg.mxu0
  %v121 = vld [vmem:[%s5] sm:$0x1]
  %v122 = vld [vmem:[%s6] sm:$0x1]
  %v123 = vmul.f32 %v122, 0.0625
  %v124 = vmax.f32 %v123, 0.0
  %v125 = vadd.f32 %v124, 1e-05
  %v126 = vrsqrt.pop %v125
  %v127 = vld [vmem:[%s3] sm:$0x1]
  %v129 = vlaneseq
  %v130 = vshrl.u32 %v129, 7
  %v131 = vsub.s32 0, %v130
  %v132 = vrot.slane %v121, %v131
  %v134 = vsub.f32 %v113, %v132
  %v135 = vsub.f32 %v118, %v132
  %v137 = vlaneseq
  %v138 = vshrl.u32 %v137, 7
  %v139 = vsub.s32 0, %v138
  %v140 = vrot.slane %v127, %v139
  %v142 = vmul.f32 %v140, %v134
  %v143 = vmul.f32 %v140, %v135
  %v145 = vlaneseq
  %v146 = vshrl.u32 %v145, 7
  %v147 = vsub.s32 0, %v146
  %v148 = vrot.slane %v126, %v147
  %v150 = vmul.f32 %v142, %v148
  %v151 = vmul.f32 %v143, %v148
  %v152 = vld [vmem:[%s4] sm:$0x1]
  %v154 = vlaneseq
  %v155 = vshrl.u32 %v154, 7
  %v156 = vsub.s32 0, %v155
  %v157 = vrot.slane %v152, %v156
  %v159 = vadd.f32 %v150, %v157
  %v160 = vadd.f32 %v151, %v157
  %v161 = vmax.f32 %v159, 0.0
  %v162 = vmax.f32 %v160, 0.0
  %163 = vst [vmem:[%s7] sm:$0xff] %v161
  %164 = vst [vmem:[%s7 + $0x8] sm:$0xff] %v162
  // Predicated region
  $region30: #{transition_up.6} parent=0 // pred_check
    _
  $region31: #{transition_up.6} parent=0 // pred_check_branch
    %166 = sbr.rel (0) target = $region33
  $region32: #{transition_up.6} parent=0 // pred_region
    _
  $region33: #{transition_up.6} parent=0 // pred_fallthru
    _
  // Predicated region
  $region34: #{transition_up.6} parent=0 // pred_check
    _
  $region35: #{transition_up.6} parent=0 // pred_check_branch
    %168 = sbr.rel (0) target = $region37
  $region36: #{transition_up.6} parent=0 // pred_region
    _
  $region37: #{transition_up.6} parent=0 // pred_fallthru
    _

// kernel: transition_up.5
$region0: #{transition_up.5}
  #allocation0 [shape = 'u32[]', space=smem, size = 0x4, offset = 0x4, fixed_abs, tag = 'smem constant byte address 0x4 - core index']
  #allocation1 [shape = 'u32[144,128]{1,0:T(1,128)}', space=vmem, size = 0x12000, scoped, tag = 'internal scratch']
  %s0 = inlined_call_operand.vmem [shape: f32[16,32], index: 0, kind: input, shape index: {}]
  %s1 = inlined_call_operand.vmem [shape: f32[32,128], index: 1, kind: input, shape index: {}]
  %s2 = inlined_call_operand.vmem [shape: f32[1,128], index: 2, kind: input, shape index: {}]
  %s3 = inlined_call_operand.vmem [shape: f32[1,1,128], index: 3, kind: output, shape index: {0}]
  %s4 = inlined_call_operand.vmem [shape: f32[1,1,128], index: 4, kind: output, shape index: {1}]
  %5 = xla_tuple %s3, %s4
  %s6 = sld [smem:[#allocation0]]
  $region38: #{transition_up.5} parent=0
    _
  %s8 = ssub.s32 1, %s6
  %s9 = scalar_select 0, %s8, %s6
  // Predicated region
  $region2: #{transition_up.5} parent=0 // pred_check
    _
  $region3: #{transition_up.5} parent=0 // pred_check_branch
    %11 = sbr.rel (0) target = $region5
  $region4: #{transition_up.5} parent=0 // pred_region
    %s12 = sadd.s32 0, 0
    %s13 = smul.u32 2, %s12
    %p14 = scmp.lt.s32.totalorder %s13, 1
    %s15 = scalar_select %p14, %s13, 1
    %s16 = smul.addr %s15, 8
    %s17 = scalar_lea.vmem %s0, %s16
    %s18 = sadd.s32 0, 0
    %s19 = smul.u32 2, %s18
  $region5: #{transition_up.5} parent=0 // pred_fallthru
    _
  // Predicated region
  $region6: #{transition_up.5} parent=0 // pred_check
    _
  $region7: #{transition_up.5} parent=0 // pred_check_branch
    %21 = sbr.rel (0) target = $region9
  $region8: #{transition_up.5} parent=0 // pred_region
    _
  $region9: #{transition_up.5} parent=0 // pred_fallthru
    _
  // Predicated region
  $region10: #{transition_up.5} parent=0 // pred_check
    _
  $region11: #{transition_up.5} parent=0 // pred_check_branch
    %23 = sbr.rel (0) target = $region13
  $region12: #{transition_up.5} parent=0 // pred_region
    _
  $region13: #{transition_up.5} parent=0 // pred_fallthru
    _
  %s24 = sadd.s32 0, 0
  %s25 = smul.u32 2, %s24
  %p26 = scmp.lt.s32.totalorder %s25, 1
  %s27 = scalar_select %p26, %s25, 1
  %s28 = smul.addr %s27, 8
  %s29 = scalar_lea.vmem %s0, %s28
  %s30 = sadd.s32 0, 0
  %s31 = smul.u32 2, %s30
  %p32 = scmp.lt.s32.totalorder %s31, 1
  %s33 = scalar_select %p32, %s31, 1
  %s34 = smul.addr %s33, 8
  %s35 = scalar_lea.vmem %s0, %s34
  %s36 = sadd.s32 0, 0
  %s37 = smul.u32 2, %s36
  %v38 = vld [vmem:[%s35] sm:$0xff]
  %v39 = vld [vmem:[%s35 + $0x8] sm:$0xff]
  %v40 = vld [vmem:[%s1] sm:$0xff]
  %v41 = vld [vmem:[%s1 + $0x8] sm:$0xff]
  %v42 = vld [vmem:[%s1 + $0x10] sm:$0xff]
  %v43 = vld [vmem:[%s1 + $0x18] sm:$0xff]
  %v44 = vld [vmem:[%s2] sm:$0x1]
  %v46 = vlaneseq
  %v47 = vshrl.u32 %v46, 7
  %v48 = vsub.s32 0, %v47
  %v49 = vrot.slane %v44, %v48
  %vm51 = vcmask 261120
  %v53 = vsel %vm51, %v38, 0
  %v56 = vsel %vm51, %v39, 0
  %58 = vmatprep.subr.mxu0 0.0
  %59 = vmatpush1.msra.mxu0 0.0
  %60 = vmatprep.subr.mxu0 0.0
  %61 = vmatpush1.msra.mxu0 0.0
  %62 = vmatprep.subr.mxu0 0.0
  %63 = vmatpush1.msra.mxu0 0.0
  %64 = vmatprep.subr.mxu0 0.0
  %65 = vmatpush1.msra.mxu0 0.0
  %66 = vmatprep.subr.mxu0 0.0
  %67 = vmatpush1.msra.mxu0 0.0
  %68 = vmatprep.subr.mxu0 0.0
  %69 = vmatpush1.msra.mxu0 0.0
  %70 = vmatprep.subr.mxu0 0.0
  %71 = vmatpush1.msra.mxu0 0.0
  %72 = vmatprep.subr.mxu0 0.0
  %73 = vmatpush1.msra.mxu0 0.0
  %74 = vmatprep.subr.mxu0 0.0
  %75 = vmatpush1.msra.mxu0 0.0
  %76 = vmatprep.subr.mxu0 0.0
  %77 = vmatpush1.msra.mxu0 0.0
  %78 = vmatprep.subr.mxu0 0.0
  %79 = vmatpush1.msra.mxu0 0.0
  %80 = vmatprep.subr.mxu0 0.0
  %81 = vmatpush1.msra.mxu0 0.0
  %82 = vmatprep.subr.mxu0 0.0
  %83 = vmatpush1.msra.mxu0 %v43
  %84 = vmatprep.subr.mxu0 0.0
  %85 = vmatpush1.msra.mxu0 %v42
  %86 = vmatprep.subr.mxu0 0.0
  %87 = vmatpush1.msra.mxu0 %v41
  %88 = vmatprep.subr.mxu0 0.0
  %89 = vmatpush1.msra.mxu0 %v40
  %90 = vmatprep.subr.mxu0 0.0
  %91 = vmatpush2.msra.mxu0 0.0
  %92 = vmatprep.subr.mxu0 0.0
  %93 = vmatpush2.msra.mxu0 0.0
  %94 = vmatprep.subr.mxu0 0.0
  %95 = vmatpush2.msra.mxu0 0.0
  %96 = vmatprep.subr.mxu0 0.0
  %97 = vmatpush2.msra.mxu0 0.0
  %98 = vmatprep.subr.mxu0 0.0
  %99 = vmatpush2.msra.mxu0 0.0
  %100 = vmatprep.subr.mxu0 0.0
  %101 = vmatpush2.msra.mxu0 0.0
  %102 = vmatprep.subr.mxu0 0.0
  %103 = vmatpush2.msra.mxu0 0.0
  %104 = vmatprep.subr.mxu0 0.0
  %105 = vmatpush2.msra.mxu0 0.0
  %106 = vmatprep.subr.mxu0 0.0
  %107 = vmatpush2.msra.mxu0 0.0
  %108 = vmatprep.subr.mxu0 0.0
  %109 = vmatpush2.msra.mxu0 0.0
  %110 = vmatprep.subr.mxu0 0.0
  %111 = vmatpush2.msra.mxu0 0.0
  %112 = vmatprep.subr.mxu0 0.0
  %113 = vmatpush2.msra.mxu0 0.0
  %114 = vmatprep.subr.mxu0 0.0
  %115 = vmatpush2.msra.mxu0 0.0
  %116 = vmatprep.subr.mxu0 0.0
  %117 = vmatpush2.msra.mxu0 0.0
  %118 = vmatprep.subr.mxu0 0.0
  %119 = vmatpush2.msra.mxu0 0.0
  %120 = vmatprep.subr.mxu0 0.0
  %121 = vmatpush2.msra.mxu0 0.0
  %122 = vmatprep.mubr.f32.mxu0 0.0
  %123 = vmatmul.mubr.f32.gmra.mxu0 %v53
  %v124 = vpop.f32.mrf.mxu0
  %v125 = vadd.f32 %v49, %v124
  %v126 = vpop.f32.mrf.mxu0
  %127 = vmatprep.mubr.f32.mxu0 0.0
  %128 = vmatmul.mubr.f32.gmra.mxu0 %v56
  %v129 = vpop.f32.mrf.mxu0
  %v130 = vadd.f32 %v49, %v129
  %v131 = vpop.f32.mrf.mxu0
  %132 = vdwg.mxu0
  %v133 = vadd.f32 %v125, %v130
  %v134 = vrot.slane %v133, 4
  %v135 = vadd.f32 %v133, %v134
  %v136 = vrot.slane %v135, 2
  %v137 = vadd.f32 %v135, %v136
  %v138 = vrot.slane %v137, 1
  %v139 = vadd.f32 %v137, %v138
  %v140 = vmul.f32 %v139, 0.0625
  %v141 = vsub.f32 %v125, %v140
  %v142 = vsub.f32 %v130, %v140
  %v143 = vmul.f32 %v141, %v141
  %v144 = vmul.f32 %v142, %v142
  %v145 = vadd.f32 %v143, %v144
  %v146 = vrot.slane %v145, 4
  %v147 = vadd.f32 %v145, %v146
  %v148 = vrot.slane %v147, 2
  %v149 = vadd.f32 %v147, %v148
  %v150 = vrot.slane %v149, 1
  %v151 = vadd.f32 %v149, %v150
  %p152 = scmp.eq.s32.totalorder 0, 0
  // Predicated region
  $region14: #{transition_up.5} parent=0 // pred_check
    %p153 = pneg %p152
  $region15: #{transition_up.5} parent=0 // pred_check_branch
    %155 = sbr.rel (%p153) target = $region17
  $region16: #{transition_up.5} parent=0 // pred_region
    %156 = vst [vmem:[%s3] sm:$0x1] %v140
    %157 = vst [vmem:[%s4] sm:$0x1] %v151
  $region17: #{transition_up.5} parent=0 // pred_fallthru
    _
  %p158 = scmp.gt.s32.totalorder 0, 0
  // Predicated region
  $region18: #{transition_up.5} parent=0 // pred_check
    %p159 = pneg %p158
  $region19: #{transition_up.5} parent=0 // pred_check_branch
    %161 = sbr.rel (%p159) target = $region21
  $region20: #{transition_up.5} parent=0 // pred_region
    %s162 = smul.u32 0, 16
    %s163 = scvt.s32.f32 %s162
    %s164 = sadd.f32 %s163, 16.0
    %v165 = vld [vmem:[%s3] sm:$0x1]
    %v166 = vsub.f32 %v140, %v165
    %v167 = vstv %s164
    %v168 = vrcp.pop %v167
    %s169 = vtos %v168
    %s170 = smul.f32 16.0, %s169
    %v171 = vstv %s170
    %v172 = vmul.f32 %v166, %v171
    %v173 = vadd.f32 %v165, %v172
    %174 = vst [vmem:[%s3] sm:$0x1] %v173
    %v175 = vld [vmem:[%s4] sm:$0x1]
    %v176 = vadd.f32 %v175, %v151
    %v177 = vmul.f32 %v166, %v166
    %s178 = smul.f32 %s163, 16.0
    %v179 = vstv %s164
    %v180 = vrcp.pop %v179
    %s181 = vtos %v180
    %s182 = smul.f32 %s178, %s181
    %v183 = vstv %s182
    %v184 = vmul.f32 %v177, %v183
    %v185 = vadd.f32 %v176, %v184
    %186 = vst [vmem:[%s4] sm:$0x1] %v185
  $region21: #{transition_up.5} parent=0 // pred_fallthru
    _
  // Predicated region
  $region22: #{transition_up.5} parent=0 // pred_check
    _
  $region23: #{transition_up.5} parent=0 // pred_check_branch
    %188 = sbr.rel (0) target = $region25
  $region24: #{transition_up.5} parent=0 // pred_region
    _
  $region25: #{transition_up.5} parent=0 // pred_fallthru
    _
  // Predicated region
  $region26: #{transition_up.5} parent=0 // pred_check
    _
  $region27: #{transition_up.5} parent=0 // pred_check_branch
    %190 = sbr.rel (0) target = $region29
  $region28: #{transition_up.5} parent=0 // pred_region
    _
  $region29: #{transition_up.5} parent=0 // pred_fallthru
    _
  // Predicated region
  $region30: #{transition_up.5} parent=0 // pred_check
    _
  $region31: #{transition_up.5} parent=0 // pred_check_branch
    %192 = sbr.rel (0) target = $region33
  $region32: #{transition_up.5} parent=0 // pred_region
    _
  $region33: #{transition_up.5} parent=0 // pred_fallthru
    _
  // Predicated region
  $region34: #{transition_up.5} parent=0 // pred_check
    _
  $region35: #{transition_up.5} parent=0 // pred_check_branch
    %194 = sbr.rel (0) target = $region37
  $region36: #{transition_up.5} parent=0 // pred_region
    _
  $region37: #{transition_up.5} parent=0 // pred_fallthru
    _

// kernel: transition_up.9
$region0: #{transition_up.9}
  #allocation0 [shape = 'u32[]', space=smem, size = 0x4, offset = 0x4, fixed_abs, tag = 'smem constant byte address 0x4 - core index']
  #allocation1 [shape = 'u32[144,128]{1,0:T(1,128)}', space=vmem, size = 0x12000, scoped, tag = 'internal scratch']
  %s0 = inlined_call_operand.vmem [shape: f32[2,3,128], index: 0, kind: input, shape index: {}]
  %s1 = inlined_call_operand.vmem [shape: f32[2,16,3], index: 1, kind: input, shape index: {}]
  %s2 = inlined_call_operand.vmem [shape: f32[2,128,128], index: 2, kind: input, shape index: {}]
  %s3 = inlined_call_operand.vmem [shape: f32[2,16,128], index: 3, kind: input, shape index: {}]
  %s4 = inlined_call_operand.hbm [shape: f32[2,16,128], index: 4, kind: output, shape index: {}]
  %s5 = sld [smem:[#allocation0]]
  $region49: #{transition_up.9} parent=0
    _
  %s7 = ssub.s32 1, %s5
  %s8 = scalar_select 0, %s7, %s5
  $region1: #{transition_up.9} parent=0
    #allocation2 [shape = 'u8[16384]{0}', space=vmem, size = 0x4000, scoped, tag = 'output window, operand 0']
    #allocation3 [shape = 's32[2]{0}', space=sflag, size = 0x8, scoped, tag = 'scoped memory for transition_up.9']
    %9 = vsyncpa [#allocation3], 0
    %s10 = scalar_lea.sflag [#allocation3], 1
    %11 = vsyncpa %s10, 0
    loop: start=0, step=1, limit=4
    $region2: #{transition_up.9} parent=1 // loop_pre_header
      _
    $region3: #{transition_up.9} parent=1 // loop_header
      %s13 = sphi 0, %s17
      %p14 = scmp.ge.s32.totalorder %s13, 4
      %s20 = sphi 0, %s32
      %s21 = sphi 0, %s28
      %s22 = sphi 0, %s20
      %s23 = sphi 0, %s21
      %s24 = sphi 0, %s22
      %s25 = sphi 0, %s23
      %s35 = sphi 0, %s37
      %s38 = sphi 0, %s35
      %s39 = sphi 0, %s38
      %s55 = sphi 0, %s39
      %s63 = sphi 0, %s65
      %s66 = sphi 0, %s63
      %s67 = sphi 0, %s66
      %s83 = sphi 0, %s67
      %s89 = sphi 0, %s91
      %s92 = sphi 0, %s89
      %s93 = sphi 0, %s92
      %s109 = sphi 0, %s93
      %s117 = sphi 0, %s119
      %s120 = sphi 0, %s117
      %s121 = sphi 0, %s120
      %s137 = sphi 0, %s121
      %s145 = sphi 0, %s147
      %s148 = sphi 0, %s145
      %s149 = sphi 0, %s148
      %s165 = sphi 0, %s149
    $region4: #{transition_up.9} parent=1 // loop_header_branch
      %16 = sbr.rel (%p14) target = $region8
    $region5: #{transition_up.9} parent=1 // loop_body
      %s18 = ssub.s32 %s13, 1
      %s19 = ssub.s32 %s13, 2
      %s26 = sadd.s32 1, %s21
      %p27 = scmp.ge.s32.totalorder %s26, 1
      %s28 = scalar_select %p27, 0, %s26
      %s29 = sadd.s32 1, %s20
      %s30 = scalar_select %p27, %s29, %s20
      %p31 = scmp.ge.s32.totalorder %s30, 2
      %s32 = scalar_select %p31, 0, %s30
      %s33 = ssub.s32 %s20, %s32
      %p34 = scmp.eq.s32.totalorder %s33, 0
      %s36 = sadd.s32 %s35, 1
      %s37 = scalar_select %p34, %s35, %s36
      %p40 = pneg %p34
      %p41 = scmp.eq.s32.totalorder %s13, 1
      %p42 = por %p40, %p41
      %p43 = scmp.ne.s32.totalorder %s35, %s38
      %p44 = scmp.eq.s32.totalorder %s13, 0
      %p45 = por %p43, %p44
      %p46 = scmp.ne.s32.totalorder %s35, %s38
      %p47 = scmp.eq.s32.totalorder %s18, 1
      %p48 = por %p46, %p47
      %p49 = scmp.ne.s32.totalorder %s38, %s39
      %p50 = scmp.eq.s32.totalorder %s18, 0
      %p51 = por %p49, %p50
      %p52 = scmp.ne.s32.totalorder %s38, %s39
      %p53 = scmp.eq.s32.totalorder %s19, 1
      %p54 = por %p52, %p53
      %p56 = scmp.ne.s32.totalorder %s39, %s55
      %p57 = scmp.eq.s32.totalorder %s19, 0
      %p58 = por %p56, %p57
      %s59 = ssub.s32 %s20, %s32
      %s60 = ssub.s32 %s21, %s28
      %s61 = sor.u32 %s59, %s60
      %p62 = scmp.eq.s32.totalorder %s61, 0
      %s64 = sadd.s32 %s63, 1
      %s65 = scalar_select %p62, %s63, %s64
      %p68 = pneg %p62
      %p69 = scmp.eq.s32.totalorder %s13, 1
      %p70 = por %p68, %p69
      %p71 = scmp.ne.s32.totalorder %s63, %s66
      %p72 = scmp.eq.s32.totalorder %s13, 0
      %p73 = por %p71, %p72
      %p74 = scmp.ne.s32.totalorder %s63, %s66
      %p75 = scmp.eq.s32.totalorder %s18, 1
      %p76 = por %p74, %p75
      %p77 = scmp.ne.s32.totalorder %s66, %s67
      %p78 = scmp.eq.s32.totalorder %s18, 0
      %p79 = por %p77, %p78
      %p80 = scmp.ne.s32.totalorder %s66, %s67
      %p81 = scmp.eq.s32.totalorder %s19, 1
      %p82 = por %p80, %p81
      %p84 = scmp.ne.s32.totalorder %s67, %s83
      %p85 = scmp.eq.s32.totalorder %s19, 0
      %p86 = por %p84, %p85
      %s87 = ssub.s32 %s20, %s32
      %p88 = scmp.eq.s32.totalorder %s87, 0
      %s90 = sadd.s32 %s89, 1
      %s91 = scalar_select %p88, %s89, %s90
      %p94 = pneg %p88
      %p95 = scmp.eq.s32.totalorder %s13, 1
      %p96 = por %p94, %p95
      %p97 = scmp.ne.s32.totalorder %s89, %s92
      %p98 = scmp.eq.s32.totalorder %s13, 0
      %p99 = por %p97, %p98
      %p100 = scmp.ne.s32.totalorder %s89, %s92
      %p101 = scmp.eq.s32.totalorder %s18, 1
      %p102 = por %p100, %p101
      %p103 = scmp.ne.s32.totalorder %s92, %s93
      %p104 = scmp.eq.s32.totalorder %s18, 0
      %p105 = por %p103, %p104
      %p106 = scmp.ne.s32.totalorder %s92, %s93
      %p107 = scmp.eq.s32.totalorder %s19, 1
      %p108 = por %p106, %p107
      %p110 = scmp.ne.s32.totalorder %s93, %s109
      %p111 = scmp.eq.s32.totalorder %s19, 0
      %p112 = por %p110, %p111
      %s113 = ssub.s32 %s20, %s32
      %s114 = ssub.s32 %s21, %s28
      %s115 = sor.u32 %s113, %s114
      %p116 = scmp.eq.s32.totalorder %s115, 0
      %s118 = sadd.s32 %s117, 1
      %s119 = scalar_select %p116, %s117, %s118
      %p122 = pneg %p116
      %p123 = scmp.eq.s32.totalorder %s13, 1
      %p124 = por %p122, %p123
      %p125 = scmp.ne.s32.totalorder %s117, %s120
      %p126 = scmp.eq.s32.totalorder %s13, 0
      %p127 = por %p125, %p126
      %p128 = scmp.ne.s32.totalorder %s117, %s120
      %p129 = scmp.eq.s32.totalorder %s18, 1
      %p130 = por %p128, %p129
      %p131 = scmp.ne.s32.totalorder %s120, %s121
      %p132 = scmp.eq.s32.totalorder %s18, 0
      %p133 = por %p131, %p132
      %p134 = scmp.ne.s32.totalorder %s120, %s121
      %p135 = scmp.eq.s32.totalorder %s19, 1
      %p136 = por %p134, %p135
      %p138 = scmp.ne.s32.totalorder %s121, %s137
      %p139 = scmp.eq.s32.totalorder %s19, 0
      %p140 = por %p138, %p139
      %s141 = ssub.s32 %s20, %s32
      %s142 = ssub.s32 %s21, %s28
      %s143 = sor.u32 %s141, %s142
      %p144 = scmp.eq.s32.totalorder %s143, 0
      %s146 = sadd.s32 %s145, 1
      %s147 = scalar_select %p144, %s145, %s146
      %p150 = pneg %p144
      %p151 = scmp.eq.s32.totalorder %s13, 1
      %p152 = por %p150, %p151
      %p153 = scmp.ne.s32.totalorder %s145, %s148
      %p154 = scmp.eq.s32.totalorder %s13, 0
      %p155 = por %p153, %p154
      %p156 = scmp.ne.s32.totalorder %s145, %s148
      %p157 = scmp.eq.s32.totalorder %s18, 1
      %p158 = por %p156, %p157
      %p159 = scmp.ne.s32.totalorder %s148, %s149
      %p160 = scmp.eq.s32.totalorder %s18, 0
      %p161 = por %p159, %p160
      %p162 = scmp.ne.s32.totalorder %s148, %s149
      %p163 = scmp.eq.s32.totalorder %s19, 1
      %p164 = por %p162, %p163
      %p166 = scmp.ne.s32.totalorder %s149, %s165
      %p167 = scmp.eq.s32.totalorder %s19, 0
      %p168 = por %p166, %p167
      %p169 = scmp.le.s32.totalorder 1, %s13
      %p170 = scmp.lt.s32.totalorder %s13, 3
      %p171 = pnand %p169, %p170
      %p172 = pneg %p171
      // Predicated region
      $region9: #{transition_up.9} parent=5 // pred_check
        _
      $region10: #{transition_up.9} parent=5 // pred_check_branch
        %174 = sbr.rel (%p171) target = $region12
      $region11: #{transition_up.9} parent=5 // pred_region
        %s175 = ssub.s32 %s13, 1
      $region12: #{transition_up.9} parent=5 // pred_fallthru
        _
      %p176 = scmp.lt.s32.totalorder %s13, 2
      // Predicated region
      $region13: #{transition_up.9} parent=5 // pred_check
        %p177 = pneg %p176
      $region14: #{transition_up.9} parent=5 // pred_check_branch
        %179 = sbr.rel (%p177) target = $region16
      $region15: #{transition_up.9} parent=5 // pred_region
        // Predicated region
        $region17: #{transition_up.9} parent=15 // pred_check
          %p180 = pneg %p45
        $region18: #{transition_up.9} parent=15 // pred_check_branch
          %182 = sbr.rel (%p180) target = $region20
        $region19: #{transition_up.9} parent=15 // pred_region
          %p183 = scmp.lt.s32.totalorder %s20, 1
          %s184 = scalar_select %p183, %s20, 1
          %s185 = smul.addr %s184, 4
          %s186 = scalar_lea.vmem %s0, %s185
        $region20: #{transition_up.9} parent=15 // pred_fallthru
          _
        // Predicated region
        $region21: #{transition_up.9} parent=15 // pred_check
          %p187 = pneg %p73
        $region22: #{transition_up.9} parent=15 // pred_check_branch
          %189 = sbr.rel (%p187) target = $region24
        $region23: #{transition_up.9} parent=15 // pred_region
          %s190 = smul.u32 2, %s21
          %p191 = scmp.lt.s32.totalorder %s20, 1
          %s192 = scalar_select %p191, %s20, 1
          %p193 = scmp.lt.s32.totalorder %s190, 1
          %s194 = scalar_select %p193, %s190, 1
          %s195 = smul.addr %s192, 2
          %s196 = sadd.s32 %s194, %s195
          %s197 = smul.addr %s196, 8
          %s198 = scalar_lea.vmem %s1, %s197
          %s199 = smul.u32 2, %s21
        $region24: #{transition_up.9} parent=15 // pred_fallthru
          _
        // Predicated region
        $region25: #{transition_up.9} parent=15 // pred_check
          %p200 = pneg %p99
        $region26: #{transition_up.9} parent=15 // pred_check_branch
          %202 = sbr.rel (%p200) target = $region28
        $region27: #{transition_up.9} parent=15 // pred_region
          %p203 = scmp.lt.s32.totalorder %s20, 1
          %s204 = scalar_select %p203, %s20, 1
          %s205 = smul.addr %s204, 16
          %s206 = smul.addr %s205, 8
          %s207 = scalar_lea.vmem %s2, %s206
        $region28: #{transition_up.9} parent=15 // pred_fallthru
          _
        // Predicated region
        $region29: #{transition_up.9} parent=15 // pred_check
          %p208 = pneg %p127
        $region30: #{transition_up.9} parent=15 // pred_check_branch
          %210 = sbr.rel (%p208) target = $region32
        $region31: #{transition_up.9} parent=15 // pred_region
          %s211 = smul.u32 2, %s21
          %p212 = scmp.lt.s32.totalorder %s20, 1
          %s213 = scalar_select %p212, %s20, 1
          %p214 = scmp.lt.s32.totalorder %s211, 1
          %s215 = scalar_select %p214, %s211, 1
          %s216 = smul.addr %s213, 2
          %s217 = sadd.s32 %s215, %s216
          %s218 = smul.addr %s217, 8
          %s219 = scalar_lea.vmem %s3, %s218
          %s220 = smul.u32 2, %s21
        $region32: #{transition_up.9} parent=15 // pred_fallthru
          _
      $region16: #{transition_up.9} parent=5 // pred_fallthru
        _
      %p221 = scmp.le.s32.totalorder 1, %s13
      %p222 = scmp.lt.s32.totalorder %s13, 3
      %p223 = pnand %p221, %p222
      %p224 = pneg %p223
      // Predicated region
      $region33: #{transition_up.9} parent=5 // pred_check
        _
      $region34: #{transition_up.9} parent=5 // pred_check_branch
        %226 = sbr.rel (%p223) target = $region36
      $region35: #{transition_up.9} parent=5 // pred_region
        %s227 = ssub.s32 %s13, 1
        %p228 = scmp.lt.s32.totalorder %s22, 1
        %s229 = scalar_select %p228, %s22, 1
        %s230 = smul.addr %s229, 4
        %s231 = scalar_lea.vmem %s0, %s230
        %p232 = pneg %p51
        %p233 = pneg %p48
        %s234 = smul.u32 2, %s23
        %p235 = scmp.lt.s32.totalorder %s22, 1
        %s236 = scalar_select %p235, %s22, 1
        %p237 = scmp.lt.s32.totalorder %s234, 1
        %s238 = scalar_select %p237, %s234, 1
        %s239 = smul.addr %s236, 2
        %s240 = sadd.s32 %s238, %s239
        %s241 = smul.addr %s240, 8
        %s242 = scalar_lea.vmem %s1, %s241
        %p243 = pneg %p79
        %p244 = pneg %p76
        %p245 = scmp.lt.s32.totalorder %s22, 1
        %s246 = scalar_select %p245, %s22, 1
        %s247 = smul.addr %s246, 16
        %s248 = smul.addr %s247, 8
        %s249 = scalar_lea.vmem %s2, %s248
        %p250 = pneg %p105
        %p251 = pneg %p102
        %s252 = smul.u32 2, %s23
        %p253 = scmp.lt.s32.totalorder %s22, 1
        %s254 = scalar_select %p253, %s22, 1
        %p255 = scmp.lt.s32.totalorder %s252, 1
        %s256 = scalar_select %p255, %s252, 1
        %s257 = smul.addr %s254, 2
        %s258 = sadd.s32 %s256, %s257
        %s259 = smul.addr %s258, 8
        %s260 = scalar_lea.vmem %s3, %s259
        %p261 = pneg %p133
        %p262 = pneg %p130
        %p263 = pneg %p161
        %p264 = pneg %p158
        %s265 = sand.u32 %s148, 1
        %s266 = scalar_lea.sflag [#allocation3], %s265
        %s267 = sand.u32 %s148, 1
        %s268 = smul.addr %s267, 16
        %s269 = scalar_lea.vmem [#allocation2], %s268
        %p270 = scmp.lt.s32.totalorder %s22, 1
        %s271 = scalar_select %p270, %s22, 1
        %s272 = smul.addr %s271, 4
        %s273 = scalar_lea.vmem %s0, %s272
        %s274 = smul.u32 2, %s23
        %p275 = scmp.lt.s32.totalorder %s22, 1
        %s276 = scalar_select %p275, %s22, 1
        %p277 = scmp.lt.s32.totalorder %s274, 1
        %s278 = scalar_select %p277, %s274, 1
        %s279 = smul.addr %s276, 2
        %s280 = sadd.s32 %s278, %s279
        %s281 = smul.addr %s280, 8
        %s282 = scalar_lea.vmem %s1, %s281
        %s283 = smul.u32 2, %s23
        %p284 = scmp.lt.s32.totalorder %s22, 1
        %s285 = scalar_select %p284, %s22, 1
        %s286 = smul.addr %s285, 16
        %s287 = smul.addr %s286, 8
        %s288 = scalar_lea.vmem %s2, %s287
        %s289 = smul.u32 2, %s23
        %p290 = scmp.lt.s32.totalorder %s22, 1
        %s291 = scalar_select %p290, %s22, 1
        %p292 = scmp.lt.s32.totalorder %s289, 1
        %s293 = scalar_select %p292, %s289, 1
        %s294 = smul.addr %s291, 2
        %s295 = sadd.s32 %s293, %s294
        %s296 = smul.addr %s295, 8
        %s297 = scalar_lea.vmem %s3, %s296
        %s298 = smul.u32 2, %s23
        %s299 = smul.u32 2, %s23
        %v300 = vld [vmem:[%s282] sm:$0xff]
        %v301 = vld [vmem:[%s282 + $0x8] sm:$0xff]
        %v302 = vld [vmem:[%s273] sm:$0x7]
        %304 = vset.pattern.permute.xlu0 0
        %305 = vperm.xlu0 %304, %v300
        %v306 = vpop.permute.xlu0 %305
        %309 = vset.pattern.permute.xlu0 0
        %310 = vperm.xlu0 %309, %v301
        %v311 = vpop.permute.xlu0 %310
        %v313 = vlaneseq
        %v314 = vshrl.u32 %v313, 7
        %v315 = vsub.s32 0, %v314
        %v316 = vrot.slane %v302, %v315
        %v317 = vsub.f32 %v306, %v316
        %v318 = vsub.f32 %v311, %v316
        %v319 = vmul.f32 %v317, %v317
        %v320 = vmul.f32 %v318, %v318
        %v321 = vadd.f32 %v319, 0.0
        %v322 = vadd.f32 %v320, 0.0
        %323 = vset.pattern.permute.xlu0 1
        %324 = vperm.xlu0 %323, %v300
        %v325 = vpop.permute.xlu0 %324
        %327 = vset.pattern.permute.xlu0 1
        %328 = vperm.xlu0 %327, %v301
        %v329 = vpop.permute.xlu0 %328
        %v331 = vlaneseq
        %v332 = vshrl.u32 %v331, 7
        %v333 = vsub.s32 1, %v332
        %v334 = vrot.slane %v302, %v333
        %v335 = vsub.f32 %v325, %v334
        %v336 = vsub.f32 %v329, %v334
        %v337 = vmul.f32 %v335, %v335
        %v338 = vmul.f32 %v336, %v336
        %v339 = vadd.f32 %v321, %v337
        %v340 = vadd.f32 %v322, %v338
        %341 = vset.pattern.permute.xlu0 2
        %342 = vperm.xlu0 %341, %v300
        %v343 = vpop.permute.xlu0 %342
        %345 = vset.pattern.permute.xlu0 2
        %346 = vperm.xlu0 %345, %v301
        %v347 = vpop.permute.xlu0 %346
        %v349 = vlaneseq
        %v350 = vshrl.u32 %v349, 7
        %v351 = vsub.s32 2, %v350
        %v352 = vrot.slane %v302, %v351
        %v353 = vsub.f32 %v343, %v352
        %v354 = vsub.f32 %v347, %v352
        %v355 = vmul.f32 %v353, %v353
        %v356 = vmul.f32 %v354, %v354
        %v357 = vadd.f32 %v339, %v355
        %v358 = vadd.f32 %v340, %v356
        %v359 = vlaneseq
        %v360 = vand.u32 %v359, 127
        %361 = vmin.xlane.f32.xlu0 %v357
        %v362 = vpop.xlane.xlu0 %361
        %363 = vmin.xlane.f32.xlu0 %v358
        %v364 = vpop.xlane.xlu0 %363
        %vm365 = vcmp.eq.f32.partialorder %v357, %v362
        %vm366 = vcmp.eq.f32.partialorder %v358, %v364
        %v367 = vsel %vm365, %v360, 128
        %v368 = vsel %vm366, %v360, 128
        %v369 = vand.u32 %v367, 65535
        %v370 = vshra.s32 %v367, 16
        %v371 = vcvt.s32.f32 %v369
        %v372 = vcvt.s32.f32 %v370
        %373 = vmin.xlane.f32.xlu0 %v372
        %v374 = vpop.xlane.xlu0 %373
        %vm375 = vcmp.eq.f32.partialorder %v372, %v374
        %v376 = vsel %vm375, %v371, inf
        %377 = vmin.xlane.f32.xlu0 %v376
        %v378 = vpop.xlane.xlu0 %377
        %v379 = vcvt.f32.s32 %v378
        %v380 = vcvt.f32.s32 %v374
        %v381 = vshll.u32 %v380, 16
        %v382 = vadd.s32 %v381, %v379
        %v383 = vand.u32 %v368, 65535
        %v384 = vshra.s32 %v368, 16
        %v385 = vcvt.s32.f32 %v383
        %v386 = vcvt.s32.f32 %v384
        %387 = vmin.xlane.f32.xlu0 %v386
        %v388 = vpop.xlane.xlu0 %387
        %vm389 = vcmp.eq.f32.partialorder %v386, %v388
        %v390 = vsel %vm389, %v385, inf
        %391 = vmin.xlane.f32.xlu0 %v390
        %v392 = vpop.xlane.xlu0 %391
        %v393 = vcvt.f32.s32 %v392
        %v394 = vcvt.f32.s32 %v388
        %v395 = vshll.u32 %v394, 16
        %v396 = vadd.s32 %v395, %v393
        %vm397 = vcmp.eq.s32.totalorder %v360, %v382
        %vm398 = vcmp.eq.s32.totalorder %v360, %v396
        %v399 = vsel %vm397, 3e+38, %v357
        %v400 = vsel %vm398, 3e+38, %v358
        %401 = vmin.xlane.f32.xlu0 %v399
        %v402 = vpop.xlane.xlu0 %401
        %403 = vmin.xlane.f32.xlu0 %v400
        %v404 = vpop.xlane.xlu0 %403
        %vm405 = vcmp.eq.f32.partialorder %v399, %v402
        %vm406 = vcmp.eq.f32.partialorder %v400, %v404
        %v407 = vsel %vm405, %v360, 128
        %v408 = vsel %vm406, %v360, 128
        %v409 = vand.u32 %v407, 65535
        %v410 = vshra.s32 %v407, 16
        %v411 = vcvt.s32.f32 %v409
        %v412 = vcvt.s32.f32 %v410
        %413 = vmin.xlane.f32.xlu0 %v412
        %v414 = vpop.xlane.xlu0 %413
        %vm415 = vcmp.eq.f32.partialorder %v412, %v414
        %v416 = vsel %vm415, %v411, inf
        %417 = vmin.xlane.f32.xlu0 %v416
        %v418 = vpop.xlane.xlu0 %417
        %v419 = vcvt.f32.s32 %v418
        %v420 = vcvt.f32.s32 %v414
        %v421 = vshll.u32 %v420, 16
        %v422 = vadd.s32 %v421, %v419
        %v423 = vand.u32 %v408, 65535
        %v424 = vshra.s32 %v408, 16
        %v425 = vcvt.s32.f32 %v423
        %v426 = vcvt.s32.f32 %v424
        %427 = vmin.xlane.f32.xlu0 %v426
        %v428 = vpop.xlane.xlu0 %427
        %vm429 = vcmp.eq.f32.partialorder %v426, %v428
        %v430 = vsel %vm429, %v425, inf
        %431 = vmin.xlane.f32.xlu0 %v430
        %v432 = vpop.xlane.xlu0 %431
        %v433 = vcvt.f32.s32 %v432
        %v434 = vcvt.f32.s32 %v428
        %v435 = vshll.u32 %v434, 16
        %v436 = vadd.s32 %v435, %v433
        %vm437 = vcmp.eq.s32.totalorder %v360, %v422
        %vm438 = vcmp.eq.s32.totalorder %v360, %v436
        %v439 = vsel %vm437, 3e+38, %v399
        %v440 = vsel %vm438, 3e+38, %v400
        %441 = vmin.xlane.f32.xlu0 %v439
        %v442 = vpop.xlane.xlu0 %441
        %443 = vmin.xlane.f32.xlu0 %v440
        %v444 = vpop.xlane.xlu0 %443
        %vm445 = vcmp.eq.f32.partialorder %v439, %v442
        %vm446 = vcmp.eq.f32.partialorder %v440, %v444
        %v447 = vsel %vm445, %v360, 128
        %v448 = vsel %vm446, %v360, 128
        %v449 = vand.u32 %v447, 65535
        %v450 = vshra.s32 %v447, 16
        %v451 = vcvt.s32.f32 %v449
        %v452 = vcvt.s32.f32 %v450
        %453 = vmin.xlane.f32.xlu0 %v452
        %v454 = vpop.xlane.xlu0 %453
        %vm455 = vcmp.eq.f32.partialorder %v452, %v454
        %v456 = vsel %vm455, %v451, inf
        %457 = vmin.xlane.f32.xlu0 %v456
        %v458 = vpop.xlane.xlu0 %457
        %v459 = vcvt.f32.s32 %v458
        %v460 = vcvt.f32.s32 %v454
        %v461 = vshll.u32 %v460, 16
        %v462 = vadd.s32 %v461, %v459
        %v463 = vand.u32 %v448, 65535
        %v464 = vshra.s32 %v448, 16
        %v465 = vcvt.s32.f32 %v463
        %v466 = vcvt.s32.f32 %v464
        %467 = vmin.xlane.f32.xlu0 %v466
        %v468 = vpop.xlane.xlu0 %467
        %vm469 = vcmp.eq.f32.partialorder %v466, %v468
        %v470 = vsel %vm469, %v465, inf
        %471 = vmin.xlane.f32.xlu0 %v470
        %v472 = vpop.xlane.xlu0 %471
        %v473 = vcvt.f32.s32 %v472
        %v474 = vcvt.f32.s32 %v468
        %v475 = vshll.u32 %v474, 16
        %v476 = vadd.s32 %v475, %v473
        %v477 = vadd.f32 %v362, 1e-08
        %v478 = vadd.f32 %v364, 1e-08
        %v479 = vrcp.pop %v477
        %v480 = vmul.f32 1.0, %v479
        %v481 = vrcp.pop %v478
        %v482 = vmul.f32 1.0, %v481
        %v483 = vadd.f32 %v402, 1e-08
        %v484 = vadd.f32 %v404, 1e-08
        %v485 = vrcp.pop %v483
        %v486 = vmul.f32 1.0, %v485
        %v487 = vrcp.pop %v484
        %v488 = vmul.f32 1.0, %v487
        %v489 = vadd.f32 %v442, 1e-08
        %v490 = vadd.f32 %v444, 1e-08
        %v491 = vrcp.pop %v489
        %v492 = vmul.f32 1.0, %v491
        %v493 = vrcp.pop %v490
        %v494 = vmul.f32 1.0, %v493
        %v495 = vadd.f32 %v480, %v486
        %v496 = vadd.f32 %v482, %v488
        %v497 = vadd.f32 %v495, %v492
        %v498 = vadd.f32 %v496, %v494
        %v499 = vsel %vm397, %v480, 0.0
        %v500 = vsel %vm398, %v482, 0.0
        %v501 = vadd.f32 %v499, 0.0
        %v502 = vadd.f32 %v500, 0.0
        %v503 = vsel %vm437, %v486, 0.0
        %v504 = vsel %vm438, %v488, 0.0
        %v505 = vadd.f32 %v501, %v503
        %v506 = vadd.f32 %v502, %v504
        %vm507 = vcmp.eq.s32.totalorder %v360, %v462
        %vm508 = vcmp.eq.s32.totalorder %v360, %v476
        %v509 = vsel %vm507, %v492, 0.0
        %v510 = vsel %vm508, %v494, 0.0
        %v511 = vadd.f32 %v505, %v509
        %v512 = vadd.f32 %v506, %v510
        %v513 = vld [vmem:[%s288] sm:$0xff]
        %v514 = vld [vmem:[%s288 + $0x8] sm:$0xff]
        %v515 = vld [vmem:[%s288 + $0x10] sm:$0xff]
        %v516 = vld [vmem:[%s288 + $0x18] sm:$0xff]
        %v517 = vld [vmem:[%s288 + $0x20] sm:$0xff]
        %v518 = vld [vmem:[%s288 + $0x28] sm:$0xff]
        %v519 = vld [vmem:[%s288 + $0x30] sm:$0xff]
        %v520 = vld [vmem:[%s288 + $0x38] sm:$0xff]
        %v521 = vld [vmem:[%s288 + $0x40] sm:$0xff]
        %v522 = vld [vmem:[%s288 + $0x48] sm:$0xff]
        %v523 = vld [vmem:[%s288 + $0x50] sm:$0xff]
        %v524 = vld [vmem:[%s288 + $0x58] sm:$0xff]
        %v525 = vld [vmem:[%s288 + $0x60] sm:$0xff]
        %v526 = vld [vmem:[%s288 + $0x68] sm:$0xff]
        %v527 = vld [vmem:[%s288 + $0x70] sm:$0xff]
        %v528 = vld [vmem:[%s288 + $0x78] sm:$0xff]
        %529 = vmatprep.subr.mxu0 0.0
        %530 = vmatpush1.msra.mxu0 %v528
        %531 = vmatprep.subr.mxu0 0.0
        %532 = vmatpush1.msra.mxu0 %v527
        %533 = vmatprep.subr.mxu0 0.0
        %534 = vmatpush1.msra.mxu0 %v526
        %535 = vmatprep.subr.mxu0 0.0
        %536 = vmatpush1.msra.mxu0 %v525
        %537 = vmatprep.subr.mxu0 0.0
        %538 = vmatpush1.msra.mxu0 %v524
        %539 = vmatprep.subr.mxu0 0.0
        %540 = vmatpush1.msra.mxu0 %v523
        %541 = vmatprep.subr.mxu0 0.0
        %542 = vmatpush1.msra.mxu0 %v522
        %543 = vmatprep.subr.mxu0 0.0
        %544 = vmatpush1.msra.mxu0 %v521
        %545 = vmatprep.subr.mxu0 0.0
        %546 = vmatpush1.msra.mxu0 %v520
        %547 = vmatprep.subr.mxu0 0.0
        %548 = vmatpush1.msra.mxu0 %v519
        %549 = vmatprep.subr.mxu0 0.0
        %550 = vmatpush1.msra.mxu0 %v518
        %551 = vmatprep.subr.mxu0 0.0
        %552 = vmatpush1.msra.mxu0 %v517
        %553 = vmatprep.subr.mxu0 0.0
        %554 = vmatpush1.msra.mxu0 %v516
        %555 = vmatprep.subr.mxu0 0.0
        %556 = vmatpush1.msra.mxu0 %v515
        %557 = vmatprep.subr.mxu0 0.0
        %558 = vmatpush1.msra.mxu0 %v514
        %559 = vmatprep.subr.mxu0 0.0
        %560 = vmatpush1.msra.mxu0 %v513
        %561 = vmatprep.subr.mxu0 0.0
        %562 = vmatpush2.msra.mxu0 0.0
        %563 = vmatprep.subr.mxu0 0.0
        %564 = vmatpush2.msra.mxu0 0.0
        %565 = vmatprep.subr.mxu0 0.0
        %566 = vmatpush2.msra.mxu0 0.0
        %567 = vmatprep.subr.mxu0 0.0
        %568 = vmatpush2.msra.mxu0 0.0
        %569 = vmatprep.subr.mxu0 0.0
        %570 = vmatpush2.msra.mxu0 0.0
        %571 = vmatprep.subr.mxu0 0.0
        %572 = vmatpush2.msra.mxu0 0.0
        %573 = vmatprep.subr.mxu0 0.0
        %574 = vmatpush2.msra.mxu0 0.0
        %575 = vmatprep.subr.mxu0 0.0
        %576 = vmatpush2.msra.mxu0 0.0
        %577 = vmatprep.subr.mxu0 0.0
        %578 = vmatpush2.msra.mxu0 0.0
        %579 = vmatprep.subr.mxu0 0.0
        %580 = vmatpush2.msra.mxu0 0.0
        %581 = vmatprep.subr.mxu0 0.0
        %582 = vmatpush2.msra.mxu0 0.0
        %583 = vmatprep.subr.mxu0 0.0
        %584 = vmatpush2.msra.mxu0 0.0
        %585 = vmatprep.subr.mxu0 0.0
        %586 = vmatpush2.msra.mxu0 0.0
        %587 = vmatprep.subr.mxu0 0.0
        %588 = vmatpush2.msra.mxu0 0.0
        %589 = vmatprep.subr.mxu0 0.0
        %590 = vmatpush2.msra.mxu0 0.0
        %591 = vmatprep.subr.mxu0 0.0
        %592 = vmatpush2.msra.mxu0 0.0
        %593 = vmatprep.mubr.f32.mxu0 0.0
        %594 = vmatmul.mubr.f32.gmra.mxu0 %v511
        %v595 = vpop.f32.mrf.mxu0
        %v596 = vadd.f32 0.0, %v595
        %v597 = vpop.f32.mrf.mxu0
        %598 = vmatprep.mubr.f32.mxu0 0.0
        %599 = vmatmul.mubr.f32.gmra.mxu0 %v512
        %v600 = vpop.f32.mrf.mxu0
        %v601 = vadd.f32 0.0, %v600
        %v602 = vpop.f32.mrf.mxu0
        %603 = vdwg.mxu0
        %v604 = vrcp.pop %v497
        %v605 = vmul.f32 %v596, %v604
        %v606 = vrcp.pop %v498
        %v607 = vmul.f32 %v601, %v606
        %v608 = vld [vmem:[%s297] sm:$0xff]
        %v609 = vld [vmem:[%s297 + $0x8] sm:$0xff]
        %v610 = vadd.f32 %v605, %v608
        %v611 = vadd.f32 %v607, %v609
        %612 = vst [vmem:[%s269] sm:$0xff] %v610
        %613 = vst [vmem:[%s269 + $0x8] sm:$0xff] %v611
        %s614 = sand.u32 %s148, 1
        %s615 = scalar_lea.sflag [#allocation3], %s614
        %s616 = sand.u32 %s148, 1
        %s617 = smul.addr %s616, 16
        %s618 = scalar_lea.vmem [#allocation2], %s617
        // Predicated region
        $region37: #{transition_up.9} parent=35 // pred_check
          %p619 = pneg %p158
        $region38: #{transition_up.9} parent=35 // pred_check_branch
          %621 = sbr.rel (%p619) target = $region40
        $region39: #{transition_up.9} parent=35 // pred_region
          %s622 = smul.u32 2, %s23
          %s624 = ssub.s32 256, 256
          %625 = vsyncadd %s615, %s624
          %s626 = smul.addr %s22, 2
          %s627 = sadd.s32 %s622, %s626
          %s628 = smul.addr %s627, 128
          %s629 = scalar_lea.hbm %s4, %s628
          %s630 = sshll.u32 %s618, 4
          %s631 = int_to_ptr.vmem [resolvable:$true] %s630
          %636 = dma.vmem_to_hbm [thread:$0]  %s631, 256, %s629, %s615, 128, 128, 8
        $region40: #{transition_up.9} parent=35 // pred_fallthru
          _
      $region36: #{transition_up.9} parent=5 // pred_fallthru
        _
      %p637 = scmp.le.s32.totalorder 2, %s13
      // Predicated region
      $region41: #{transition_up.9} parent=5 // pred_check
        %p638 = pneg %p637
      $region42: #{transition_up.9} parent=5 // pred_check_branch
        %640 = sbr.rel (%p638) target = $region44
      $region43: #{transition_up.9} parent=5 // pred_region
        %s641 = ssub.s32 %s13, 2
        // Predicated region
        $region45: #{transition_up.9} parent=43 // pred_check
          %p642 = pneg %p164
        $region46: #{transition_up.9} parent=43 // pred_check_branch
          %644 = sbr.rel (%p642) target = $region48
        $region47: #{transition_up.9} parent=43 // pred_region
          %s645 = sand.u32 %s149, 1
          %s646 = scalar_lea.sflag [#allocation3], %s645
          %s647 = sand.u32 %s149, 1
          %s648 = smul.addr %s647, 16
          %s649 = scalar_lea.vmem [#allocation2], %s648
          %650 = dma.done %s646, 256
        $region48: #{transition_up.9} parent=43 // pred_fallthru
          _
      $region44: #{transition_up.9} parent=5 // pred_fallthru
        _
    $region6: #{transition_up.9} parent=1 // loop_footer
      %s17 = sadd.s32 1, %s13
    $region7: #{transition_up.9} parent=1 // loop_footer_branch
      %12 = sbr.rel target = $region3
    $region8: #{transition_up.9} parent=1 // loop_exit
      _
    %651 = vsyncpa [#allocation3], 1
    %s652 = scalar_lea.sflag [#allocation3], 1
    %653 = vsyncpa %s652, 1

</llo_original>
